<compile_context>
chip_gen: v7x
topology: tpu7x:2x2x1
jax: 0.10.0
libtpu: 0.0.40
codegen_flags: <defaults>
</compile_context>

<pallas_src>
import functools

import jax
import jax.numpy as jnp
from jax.experimental import pallas as pl
from jax.experimental.pallas import tpu as pltpu


def _round_up(x, m):
    return (x + m - 1) // m * m


def _mrfnet_kernel(x_ref, w1_ref, b1_ref, w2_ref, b2_ref, w3_ref, b3_ref, o_ref):
    # x_ref:  (1, c_in_p, hw_t) bf16 tile -- channels on sublanes, HW on lanes.
    # w*_ref: transposed weights, bf16, resident in VMEM (constant index maps).
    # b*_ref: (C, 1) f32 biases (lane-broadcast adds into the f32 accumulator).
    x = x_ref[0]                                                     # (c_in_p, hw_t)
    h1 = jnp.dot(w1_ref[...], x, preferred_element_type=jnp.float32) + b1_ref[...]
    h1 = jnp.maximum(h1, 0.0)                                        # f32 ReLU (VPU)
    h2 = jnp.dot(w2_ref[...], h1.astype(jnp.bfloat16),
                 preferred_element_type=jnp.float32) + b2_ref[...]
    h2 = jnp.maximum(h2, 0.0)                                        # f32 ReLU (VPU)
    out = jnp.dot(w3_ref[...], h2.astype(jnp.bfloat16),
                  preferred_element_type=jnp.float32) + b3_ref[...]
    o_ref[0] = out.astype(o_ref.dtype)                               # lane-dense store


@functools.partial(jax.jit, static_argnames=("hw_tile_cap",))
def mrfnet_forward(x_nchw, params, hw_tile_cap=2048):
    w1, b1, w2, b2, w3, b3 = params
    n, c_in, h, w = x_nchw.shape
    ch_mid = w1.shape[1]
    ch_out = w3.shape[1]
    out_dtype = x_nchw.dtype

    # ---- padded sizes (zero padding is exact; padded outputs are sliced off) ----
    c_in_p = _round_up(c_in, 16)                    # bf16 sublane packing
    ch_mid_p = _round_up(ch_mid, 128)               # 400 -> 512
    ch_out_p = max(_round_up(ch_out, 16), 16)       # 3 -> 16 sublanes (not 128 lanes)

    hw = h * w
    hw_p = _round_up(hw, 128)                       # lane-dense tiles

    # ---- hw tile: largest power-of-two divisor of hw_p (capped); keep >= 4
    #      total grid steps (>= 2 per v7x TensorCore) and an even step count ----
    cands = [t for t in (2048, 1024, 512, 256, 128) if t <= max(hw_tile_cap, 128)]
    tile = max(t for t in cands if hw_p % t == 0)
    while tile > 128 and n * (hw_p // tile) < 4:
        tile //= 2
    if tile > 128 and (n * (hw_p // tile)) % 2 == 1:
        tile //= 2
    grid = (n, hw_p // tile)

    # ---- input: NCHW is already channels-major; flatten HW, zero-pad, bf16 ----
    x_flat = x_nchw.reshape(n, c_in, hw)
    x_p = jnp.pad(x_flat, ((0, 0), (0, c_in_p - c_in), (0, hw_p - hw))).astype(jnp.bfloat16)

    # ---- transposed weights in bf16 (MXU); biases as (C, 1) f32 columns ----
    w1_t = jnp.pad(w1.T, ((0, ch_mid_p - ch_mid), (0, c_in_p - c_in))).astype(jnp.bfloat16)
    w2_t = jnp.pad(w2.T, ((0, ch_mid_p - ch_mid), (0, ch_mid_p - ch_mid))).astype(jnp.bfloat16)
    w3_t = jnp.pad(w3.T, ((0, ch_out_p - ch_out), (0, ch_mid_p - ch_mid))).astype(jnp.bfloat16)
    b1_p = jnp.pad(b1, (0, ch_mid_p - ch_mid)).reshape(ch_mid_p, 1).astype(jnp.float32)
    b2_p = jnp.pad(b2, (0, ch_mid_p - ch_mid)).reshape(ch_mid_p, 1).astype(jnp.float32)
    b3_p = jnp.pad(b3, (0, ch_out_p - ch_out)).reshape(ch_out_p, 1).astype(jnp.float32)

    # Advisory cost estimate for XLA's scheduler.
    flops = 2 * n * hw_p * (c_in_p * ch_mid_p + ch_mid_p * ch_mid_p + ch_mid_p * ch_out_p)
    bytes_accessed = (
        x_p.size * 2
        + n * ch_out_p * hw_p * jnp.dtype(out_dtype).itemsize
        + (w1_t.size + w2_t.size + w3_t.size) * 2
        + (b1_p.size + b2_p.size + b3_p.size) * 4
    )

    out_p = pl.pallas_call(
        _mrfnet_kernel,
        out_shape=jax.ShapeDtypeStruct((n, ch_out_p, hw_p), out_dtype),
        grid_spec=pltpu.PrefetchScalarGridSpec(
            num_scalar_prefetch=0,
            grid=grid,
            in_specs=[
                pl.BlockSpec((1, c_in_p, tile), lambda b, j: (b, 0, j)),   # x tile
                pl.BlockSpec((ch_mid_p, c_in_p), lambda b, j: (0, 0)),     # W1^T (resident)
                pl.BlockSpec((ch_mid_p, 1), lambda b, j: (0, 0)),          # b1
                pl.BlockSpec((ch_mid_p, ch_mid_p), lambda b, j: (0, 0)),   # W2^T (resident)
                pl.BlockSpec((ch_mid_p, 1), lambda b, j: (0, 0)),          # b2
                pl.BlockSpec((ch_out_p, ch_mid_p), lambda b, j: (0, 0)),   # W3^T (resident)
                pl.BlockSpec((ch_out_p, 1), lambda b, j: (0, 0)),          # b3
            ],
            out_specs=pl.BlockSpec((1, ch_out_p, tile), lambda b, j: (b, 0, j)),
        ),
        compiler_params=pltpu.CompilerParams(
            dimension_semantics=("parallel", "parallel"),
            vmem_limit_bytes=32 * 1024 * 1024,
        ),
        cost_estimate=pl.CostEstimate(
            flops=flops, transcendentals=0, bytes_accessed=bytes_accessed),
    )(x_p, w1_t, b1_p, w2_t, b2_p, w3_t, b3_p)

    # Slice off channel/spatial padding; reshape is free (already NCHW order).
    return out_p[:, :ch_out, :hw].reshape(n, ch_out, h, w)


def init_params(key, ch_in=10, ch_out=3, mrfnet_ch=400, dtype=jnp.float32):
    """Deterministic synthetic init (Conv2d 1x1 weights stored as (C_in, C_out))."""
    k1, k2, k3, k4, k5, k6 = jax.random.split(key, 6)

    def _w(k, fan_in, fan_out):
        bound = 1.0 / jnp.sqrt(fan_in)
        return jax.random.uniform(k, (fan_in, fan_out), dtype, -bound, bound)

    def _b(k, fan_in, fan_out):
        bound = 1.0 / jnp.sqrt(fan_in)
        return jax.random.uniform(k, (fan_out,), dtype, -bound, bound)

    w1 = _w(k1, ch_in, mrfnet_ch)
    b1 = _b(k2, ch_in, mrfnet_ch)
    w2 = _w(k3, mrfnet_ch, mrfnet_ch)
    b2 = _b(k4, mrfnet_ch, mrfnet_ch)
    w3 = _w(k5, mrfnet_ch, ch_out)
    b3 = _b(k6, mrfnet_ch, ch_out)
    return (w1, b1, w2, b2, w3, b3)


def mrfnet_reference(x_nchw, params):
    """Pure-JAX f32 reference of the PyTorch forward (1x1 convs == per-pixel MLP)."""
    w1, b1, w2, b2, w3, b3 = params
    n, c, h, w = x_nchw.shape
    x = jnp.transpose(x_nchw, (0, 2, 3, 1)).reshape(-1, c)
    h1 = jnp.maximum(x @ w1 + b1, 0.0)
    h2 = jnp.maximum(h1 @ w2 + b2, 0.0)
    o = h2 @ w3 + b3
    return o.reshape(n, h, w, -1).transpose(0, 3, 1, 2)


if __name__ == "__main__":
    key = jax.random.PRNGKey(0)
    k_x, k_p = jax.random.split(key)

    # Small shapes consistent with the module: ch_in=10, ch_out=3, hidden=400.
    N, C_IN, H, W = 2, 10, 16, 16
    x = jax.random.normal(k_x, (N, C_IN, H, W), dtype=jnp.float32)
    params = init_params(k_p, ch_in=C_IN, ch_out=3, mrfnet_ch=400)

    out = mrfnet_forward(x, params)
    out = jax.block_until_ready(out)

    ref = mrfnet_reference(x, params)
    assert out.shape == (N, 3, H, W), out.shape
    # bf16 matmuls with f32 accumulation: allow ~1e-2 relative error vs f32 ref.
    assert jnp.allclose(out, ref, atol=2e-2, rtol=2e-2), "mismatch vs reference"

    print("KERNEL_OK")
</pallas_src>

<mosaic_0001>
module attributes {stable_mosaic.version = 11 : i64} {
  func.func @_mrfnet_kernel(%arg0: i32, %arg1: i32, %arg2: memref<1x16x128xbf16, #tpu.memory_space<vmem>>, %arg3: memref<512x16xbf16, #tpu.memory_space<vmem>>, %arg4: memref<512x1xf32, #tpu.memory_space<vmem>>, %arg5: memref<512x512xbf16, #tpu.memory_space<vmem>>, %arg6: memref<512x1xf32, #tpu.memory_space<vmem>>, %arg7: memref<16x512xbf16, #tpu.memory_space<vmem>>, %arg8: memref<16x1xf32, #tpu.memory_space<vmem>>, %arg9: memref<1x16x128xf32, #tpu.memory_space<vmem>>) attributes {dimension_semantics = [#tpu.dimension_semantics<parallel>, #tpu.dimension_semantics<parallel>], iteration_bounds = array<i64: 2, 2>, scalar_prefetch = 0 : i64, scratch_operands = 0 : i64, tpu.core_type = #tpu.core_type<tc>, window_params = [{transform_indices = @transform_0, window_bounds = array<i64: 1, 16, 128>}, {pipeline_mode = #tpu.pipeline_mode<synchronous>, transform_indices = @transform_1, window_bounds = array<i64: 512, 16>}, {pipeline_mode = #tpu.pipeline_mode<synchronous>, transform_indices = @transform_2, window_bounds = array<i64: 512, 1>}, {pipeline_mode = #tpu.pipeline_mode<synchronous>, transform_indices = @transform_3, window_bounds = array<i64: 512, 512>}, {pipeline_mode = #tpu.pipeline_mode<synchronous>, transform_indices = @transform_4, window_bounds = array<i64: 512, 1>}, {pipeline_mode = #tpu.pipeline_mode<synchronous>, transform_indices = @transform_5, window_bounds = array<i64: 16, 512>}, {pipeline_mode = #tpu.pipeline_mode<synchronous>, transform_indices = @transform_6, window_bounds = array<i64: 16, 1>}, {transform_indices = @transform_7, window_bounds = array<i64: 1, 16, 128>}]} {
    %c0 = arith.constant 0 : index
    %c0_0 = arith.constant 0 : index
    %c0_1 = arith.constant 0 : index
    %0 = vector.load %arg2[%c0, %c0_0, %c0_1] : memref<1x16x128xbf16, #tpu.memory_space<vmem>>, vector<1x16x128xbf16>
    %1 = vector.shape_cast %0 : vector<1x16x128xbf16> to vector<16x128xbf16>
    %c0_2 = arith.constant 0 : index
    %c0_3 = arith.constant 0 : index
    %2 = vector.load %arg3[%c0_2, %c0_3] : memref<512x16xbf16, #tpu.memory_space<vmem>>, vector<512x16xbf16>
    %cst = arith.constant dense<0.000000e+00> : vector<512x128xf32>
    %3 = tpu.matmul %2, %1, %cst {dimension_numbers = #tpu.dot_dimension_numbers<[1], [0], [0], [1], [0, 0, 1, 1], [], []>} : vector<512x16xbf16>, vector<16x128xbf16>, vector<512x128xf32> -> vector<512x128xf32>
    %c0_4 = arith.constant 0 : index
    %c0_5 = arith.constant 0 : index
    %4 = vector.load %arg4[%c0_4, %c0_5] : memref<512x1xf32, #tpu.memory_space<vmem>>, vector<512x1xf32>
    %5 = vector.broadcast %4 : vector<512x1xf32> to vector<512x128xf32>
    %6 = arith.addf %3, %5 : vector<512x128xf32>
    %cst_6 = arith.constant 0.000000e+00 : f32
    %7 = vector.broadcast %cst_6 : f32 to vector<512x128xf32>
    %8 = arith.maximumf %6, %7 : vector<512x128xf32>
    %c0_7 = arith.constant 0 : index
    %c0_8 = arith.constant 0 : index
    %9 = vector.load %arg5[%c0_7, %c0_8] : memref<512x512xbf16, #tpu.memory_space<vmem>>, vector<512x512xbf16>
    %10 = arith.truncf %8 : vector<512x128xf32> to vector<512x128xbf16>
    %cst_9 = arith.constant dense<0.000000e+00> : vector<512x128xf32>
    %11 = tpu.matmul %9, %10, %cst_9 {dimension_numbers = #tpu.dot_dimension_numbers<[1], [0], [0], [1], [0, 0, 1, 1], [], []>} : vector<512x512xbf16>, vector<512x128xbf16>, vector<512x128xf32> -> vector<512x128xf32>
    %c0_10 = arith.constant 0 : index
    %c0_11 = arith.constant 0 : index
    %12 = vector.load %arg6[%c0_10, %c0_11] : memref<512x1xf32, #tpu.memory_space<vmem>>, vector<512x1xf32>
    %13 = vector.broadcast %12 : vector<512x1xf32> to vector<512x128xf32>
    %14 = arith.addf %11, %13 : vector<512x128xf32>
    %cst_12 = arith.constant 0.000000e+00 : f32
    %15 = vector.broadcast %cst_12 : f32 to vector<512x128xf32>
    %16 = arith.maximumf %14, %15 : vector<512x128xf32>
    %c0_13 = arith.constant 0 : index
    %c0_14 = arith.constant 0 : index
    %17 = vector.load %arg7[%c0_13, %c0_14] : memref<16x512xbf16, #tpu.memory_space<vmem>>, vector<16x512xbf16>
    %18 = arith.truncf %16 : vector<512x128xf32> to vector<512x128xbf16>
    %cst_15 = arith.constant dense<0.000000e+00> : vector<16x128xf32>
    %19 = tpu.matmul %17, %18, %cst_15 {dimension_numbers = #tpu.dot_dimension_numbers<[1], [0], [0], [1], [0, 0, 1, 1], [], []>} : vector<16x512xbf16>, vector<512x128xbf16>, vector<16x128xf32> -> vector<16x128xf32>
    %c0_16 = arith.constant 0 : index
    %c0_17 = arith.constant 0 : index
    %20 = vector.load %arg8[%c0_16, %c0_17] : memref<16x1xf32, #tpu.memory_space<vmem>>, vector<16x1xf32>
    %21 = vector.broadcast %20 : vector<16x1xf32> to vector<16x128xf32>
    %22 = arith.addf %19, %21 : vector<16x128xf32>
    %c0_18 = arith.constant 0 : index
    %c0_19 = arith.constant 0 : index
    %c0_20 = arith.constant 0 : index
    %23 = vector.load %arg9[%c0_18, %c0_19, %c0_20] : memref<1x16x128xf32, #tpu.memory_space<vmem>>, vector<1x16x128xf32>
    %24 = vector.shape_cast %23 : vector<1x16x128xf32> to vector<16x128xf32>
    %25 = vector.shape_cast %22 : vector<16x128xf32> to vector<1x16x128xf32>
    tpu.vector_store %arg9[%c0_18, %c0_19, %c0_20], %25 {strides = array<i32>} : memref<1x16x128xf32, #tpu.memory_space<vmem>>, vector<1x16x128xf32>,
    return
  }
  func.func @transform_0(%arg0: i32, %arg1: i32) -> (i32, i32, i32) {
    %c0_i32 = arith.constant 0 : i32
    %c0_i32_0 = arith.constant 0 : i32
    return %arg0, %c0_i32, %arg1 : i32, i32, i32
  }
  func.func @transform_1(%arg0: i32, %arg1: i32) -> (i32, i32) {
    %c0_i32 = arith.constant 0 : i32
    %c0_i32_0 = arith.constant 0 : i32
    %c0_i32_1 = arith.constant 0 : i32
    return %c0_i32, %c0_i32_0 : i32, i32
  }
  func.func @transform_2(%arg0: i32, %arg1: i32) -> (i32, i32) {
    %c0_i32 = arith.constant 0 : i32
    %c0_i32_0 = arith.constant 0 : i32
    %c0_i32_1 = arith.constant 0 : i32
    return %c0_i32, %c0_i32_0 : i32, i32
  }
  func.func @transform_3(%arg0: i32, %arg1: i32) -> (i32, i32) {
    %c0_i32 = arith.constant 0 : i32
    %c0_i32_0 = arith.constant 0 : i32
    %c0_i32_1 = arith.constant 0 : i32
    return %c0_i32, %c0_i32_0 : i32, i32
  }
  func.func @transform_4(%arg0: i32, %arg1: i32) -> (i32, i32) {
    %c0_i32 = arith.constant 0 : i32
    %c0_i32_0 = arith.constant 0 : i32
    %c0_i32_1 = arith.constant 0 : i32
    return %c0_i32, %c0_i32_0 : i32, i32
  }
  func.func @transform_5(%arg0: i32, %arg1: i32) -> (i32, i32) {
    %c0_i32 = arith.constant 0 : i32
    %c0_i32_0 = arith.constant 0 : i32
    %c0_i32_1 = arith.constant 0 : i32
    return %c0_i32, %c0_i32_0 : i32, i32
  }
  func.func @transform_6(%arg0: i32, %arg1: i32) -> (i32, i32) {
    %c0_i32 = arith.constant 0 : i32
    %c0_i32_0 = arith.constant 0 : i32
    %c0_i32_1 = arith.constant 0 : i32
    return %c0_i32, %c0_i32_0 : i32, i32
  }
  func.func @transform_7(%arg0: i32, %arg1: i32) -> (i32, i32, i32) {
    %c0_i32 = arith.constant 0 : i32
    %c0_i32_0 = arith.constant 0 : i32
    return %arg0, %c0_i32, %arg1 : i32, i32, i32
  }
}

</mosaic_0001>

<llo_original>
// kernel: mrfnet_forward.1
$region0: #{mrfnet_forward.1}
  #allocation0 [shape = 'u32[]', space=smem, size = 0x4, offset = 0x4, fixed_abs, tag = 'smem constant byte address 0x4 - core index']
  #allocation1 [shape = 'u32[144,128]{1,0:T(1,128)}', space=vmem, size = 0x12000, scoped, tag = 'internal scratch']
  %s0 = inlined_call_operand.vmem [shape: bf16[2,16,256], index: 0, kind: input, shape index: {}]
  %s1 = inlined_call_operand.vmem [shape: bf16[512,16], index: 1, kind: input, shape index: {}]
  %s2 = inlined_call_operand.vmem [shape: f32[512,1], index: 2, kind: input, shape index: {}]
  %s3 = inlined_call_operand.vmem [shape: bf16[512,512], index: 3, kind: input, shape index: {}]
  %s4 = inlined_call_operand.vmem [shape: f32[512,1], index: 4, kind: input, shape index: {}]
  %s5 = inlined_call_operand.vmem [shape: bf16[16,512], index: 5, kind: input, shape index: {}]
  %s6 = inlined_call_operand.vmem [shape: f32[16,1], index: 6, kind: input, shape index: {}]
  %s7 = inlined_call_operand.vmem [shape: f32[2,16,256], index: 7, kind: output, shape index: {}]
  %s8 = sld [smem:[#allocation0]]
  $region136: #{mrfnet_forward.1} parent=0
    _
  %s10 = ssub.s32 1, %s8
  %s11 = scalar_select 0, %s10, %s8
  $region1: #{mrfnet_forward.1} parent=0
    #allocation2 [shape = 'u8[8192]{0}', space=vmem, size = 0x2000, scoped, tag = 'input window, operand 0']
    #allocation3 [shape = 'u8[16384]{0}', space=vmem, size = 0x4000, scoped, tag = 'output window, operand 0']
    loop: start=0, step=1, limit=6
    $region2: #{mrfnet_forward.1} parent=1 // loop_pre_header
      _
    $region3: #{mrfnet_forward.1} parent=1 // loop_header
      %s13 = sphi 0, %s17
      %p14 = scmp.ge.s32.totalorder %s13, 6
      %s20 = sphi 0, %s32
      %s21 = sphi 0, %s28
      %s22 = sphi 0, %s20
      %s23 = sphi 0, %s21
      %s24 = sphi 0, %s22
      %s25 = sphi 0, %s23
      %s37 = sphi 0, %s39
      %s40 = sphi 0, %s37
      %s41 = sphi 0, %s40
      %s57 = sphi 0, %s41
      %s61 = sphi 0, %s61
      %s63 = sphi 0, %s61
      %s64 = sphi 0, %s63
      %s78 = sphi 0, %s64
      %s82 = sphi 0, %s82
      %s84 = sphi 0, %s82
      %s85 = sphi 0, %s84
      %s99 = sphi 0, %s85
      %s103 = sphi 0, %s103
      %s105 = sphi 0, %s103
      %s106 = sphi 0, %s105
      %s120 = sphi 0, %s106
      %s124 = sphi 0, %s124
      %s126 = sphi 0, %s124
      %s127 = sphi 0, %s126
      %s141 = sphi 0, %s127
      %s145 = sphi 0, %s145
      %s147 = sphi 0, %s145
      %s148 = sphi 0, %s147
      %s162 = sphi 0, %s148
      %s166 = sphi 0, %s166
      %s168 = sphi 0, %s166
      %s169 = sphi 0, %s168
      %s183 = sphi 0, %s169
      %s191 = sphi 0, %s193
      %s194 = sphi 0, %s191
      %s195 = sphi 0, %s194
      %s211 = sphi 0, %s195
    $region4: #{mrfnet_forward.1} parent=1 // loop_header_branch
      %16 = sbr.rel (%p14) target = $region8
    $region5: #{mrfnet_forward.1} parent=1 // loop_body
      %s18 = ssub.s32 %s13, 1
      %s19 = ssub.s32 %s13, 2
      %s26 = sadd.s32 1, %s21
      %p27 = scmp.ge.s32.totalorder %s26, 2
      %s28 = scalar_select %p27, 0, %s26
      %s29 = sadd.s32 1, %s20
      %s30 = scalar_select %p27, %s29, %s20
      %p31 = scmp.ge.s32.totalorder %s30, 2
      %s32 = scalar_select %p31, 0, %s30
      %s33 = ssub.s32 %s20, %s32
      %s34 = ssub.s32 %s21, %s28
      %s35 = sor.u32 %s33, %s34
      %p36 = scmp.eq.s32.totalorder %s35, 0
      %s38 = sadd.s32 %s37, 1
      %s39 = scalar_select %p36, %s37, %s38
      %p42 = pneg %p36
      %p43 = scmp.eq.s32.totalorder %s13, 3
      %p44 = por %p42, %p43
      %p45 = scmp.ne.s32.totalorder %s37, %s40
      %p46 = scmp.eq.s32.totalorder %s13, 0
      %p47 = por %p45, %p46
      %p48 = scmp.ne.s32.totalorder %s37, %s40
      %p49 = scmp.eq.s32.totalorder %s18, 3
      %p50 = por %p48, %p49
      %p51 = scmp.ne.s32.totalorder %s40, %s41
      %p52 = scmp.eq.s32.totalorder %s18, 0
      %p53 = por %p51, %p52
      %p54 = scmp.ne.s32.totalorder %s40, %s41
      %p55 = scmp.eq.s32.totalorder %s19, 3
      %p56 = por %p54, %p55
      %p58 = scmp.ne.s32.totalorder %s41, %s57
      %p59 = scmp.eq.s32.totalorder %s19, 0
      %p60 = por %p58, %p59
      %s62 = sadd.s32 %s61, 1
      %p65 = scmp.eq.s32.totalorder %s13, 3
      %p66 = scmp.ne.s32.totalorder %s61, %s63
      %p67 = scmp.eq.s32.totalorder %s13, 0
      %p68 = por %p66, %p67
      %p69 = scmp.ne.s32.totalorder %s61, %s63
      %p70 = scmp.eq.s32.totalorder %s18, 3
      %p71 = por %p69, %p70
      %p72 = scmp.ne.s32.totalorder %s63, %s64
      %p73 = scmp.eq.s32.totalorder %s18, 0
      %p74 = por %p72, %p73
      %p75 = scmp.ne.s32.totalorder %s63, %s64
      %p76 = scmp.eq.s32.totalorder %s19, 3
      %p77 = por %p75, %p76
      %p79 = scmp.ne.s32.totalorder %s64, %s78
      %p80 = scmp.eq.s32.totalorder %s19, 0
      %p81 = por %p79, %p80
      %s83 = sadd.s32 %s82, 1
      %p86 = scmp.eq.s32.totalorder %s13, 3
      %p87 = scmp.ne.s32.totalorder %s82, %s84
      %p88 = scmp.eq.s32.totalorder %s13, 0
      %p89 = por %p87, %p88
      %p90 = scmp.ne.s32.totalorder %s82, %s84
      %p91 = scmp.eq.s32.totalorder %s18, 3
      %p92 = por %p90, %p91
      %p93 = scmp.ne.s32.totalorder %s84, %s85
      %p94 = scmp.eq.s32.totalorder %s18, 0
      %p95 = por %p93, %p94
      %p96 = scmp.ne.s32.totalorder %s84, %s85
      %p97 = scmp.eq.s32.totalorder %s19, 3
      %p98 = por %p96, %p97
      %p100 = scmp.ne.s32.totalorder %s85, %s99
      %p101 = scmp.eq.s32.totalorder %s19, 0
      %p102 = por %p100, %p101
      %s104 = sadd.s32 %s103, 1
      %p107 = scmp.eq.s32.totalorder %s13, 3
      %p108 = scmp.ne.s32.totalorder %s103, %s105
      %p109 = scmp.eq.s32.totalorder %s13, 0
      %p110 = por %p108, %p109
      %p111 = scmp.ne.s32.totalorder %s103, %s105
      %p112 = scmp.eq.s32.totalorder %s18, 3
      %p113 = por %p111, %p112
      %p114 = scmp.ne.s32.totalorder %s105, %s106
      %p115 = scmp.eq.s32.totalorder %s18, 0
      %p116 = por %p114, %p115
      %p117 = scmp.ne.s32.totalorder %s105, %s106
      %p118 = scmp.eq.s32.totalorder %s19, 3
      %p119 = por %p117, %p118
      %p121 = scmp.ne.s32.totalorder %s106, %s120
      %p122 = scmp.eq.s32.totalorder %s19, 0
      %p123 = por %p121, %p122
      %s125 = sadd.s32 %s124, 1
      %p128 = scmp.eq.s32.totalorder %s13, 3
      %p129 = scmp.ne.s32.totalorder %s124, %s126
      %p130 = scmp.eq.s32.totalorder %s13, 0
      %p131 = por %p129, %p130
      %p132 = scmp.ne.s32.totalorder %s124, %s126
      %p133 = scmp.eq.s32.totalorder %s18, 3
      %p134 = por %p132, %p133
      %p135 = scmp.ne.s32.totalorder %s126, %s127
      %p136 = scmp.eq.s32.totalorder %s18, 0
      %p137 = por %p135, %p136
      %p138 = scmp.ne.s32.totalorder %s126, %s127
      %p139 = scmp.eq.s32.totalorder %s19, 3
      %p140 = por %p138, %p139
      %p142 = scmp.ne.s32.totalorder %s127, %s141
      %p143 = scmp.eq.s32.totalorder %s19, 0
      %p144 = por %p142, %p143
      %s146 = sadd.s32 %s145, 1
      %p149 = scmp.eq.s32.totalorder %s13, 3
      %p150 = scmp.ne.s32.totalorder %s145, %s147
      %p151 = scmp.eq.s32.totalorder %s13, 0
      %p152 = por %p150, %p151
      %p153 = scmp.ne.s32.totalorder %s145, %s147
      %p154 = scmp.eq.s32.totalorder %s18, 3
      %p155 = por %p153, %p154
      %p156 = scmp.ne.s32.totalorder %s147, %s148
      %p157 = scmp.eq.s32.totalorder %s18, 0
      %p158 = por %p156, %p157
      %p159 = scmp.ne.s32.totalorder %s147, %s148
      %p160 = scmp.eq.s32.totalorder %s19, 3
      %p161 = por %p159, %p160
      %p163 = scmp.ne.s32.totalorder %s148, %s162
      %p164 = scmp.eq.s32.totalorder %s19, 0
      %p165 = por %p163, %p164
      %s167 = sadd.s32 %s166, 1
      %p170 = scmp.eq.s32.totalorder %s13, 3
      %p171 = scmp.ne.s32.totalorder %s166, %s168
      %p172 = scmp.eq.s32.totalorder %s13, 0
      %p173 = por %p171, %p172
      %p174 = scmp.ne.s32.totalorder %s166, %s168
      %p175 = scmp.eq.s32.totalorder %s18, 3
      %p176 = por %p174, %p175
      %p177 = scmp.ne.s32.totalorder %s168, %s169
      %p178 = scmp.eq.s32.totalorder %s18, 0
      %p179 = por %p177, %p178
      %p180 = scmp.ne.s32.totalorder %s168, %s169
      %p181 = scmp.eq.s32.totalorder %s19, 3
      %p182 = por %p180, %p181
      %p184 = scmp.ne.s32.totalorder %s169, %s183
      %p185 = scmp.eq.s32.totalorder %s19, 0
      %p186 = por %p184, %p185
      %s187 = ssub.s32 %s20, %s32
      %s188 = ssub.s32 %s21, %s28
      %s189 = sor.u32 %s187, %s188
      %p190 = scmp.eq.s32.totalorder %s189, 0
      %s192 = sadd.s32 %s191, 1
      %s193 = scalar_select %p190, %s191, %s192
      %p196 = pneg %p190
      %p197 = scmp.eq.s32.totalorder %s13, 3
      %p198 = por %p196, %p197
      %p199 = scmp.ne.s32.totalorder %s191, %s194
      %p200 = scmp.eq.s32.totalorder %s13, 0
      %p201 = por %p199, %p200
      %p202 = scmp.ne.s32.totalorder %s191, %s194
      %p203 = scmp.eq.s32.totalorder %s18, 3
      %p204 = por %p202, %p203
      %p205 = scmp.ne.s32.totalorder %s194, %s195
      %p206 = scmp.eq.s32.totalorder %s18, 0
      %p207 = por %p205, %p206
      %p208 = scmp.ne.s32.totalorder %s194, %s195
      %p209 = scmp.eq.s32.totalorder %s19, 3
      %p210 = por %p208, %p209
      %p212 = scmp.ne.s32.totalorder %s195, %s211
      %p213 = scmp.eq.s32.totalorder %s19, 0
      %p214 = por %p212, %p213
      %p215 = scmp.le.s32.totalorder 1, %s13
      %p216 = scmp.lt.s32.totalorder %s13, 5
      %p217 = pnand %p215, %p216
      %p218 = pneg %p217
      // Predicated region
      $region9: #{mrfnet_forward.1} parent=5 // pred_check
        _
      $region10: #{mrfnet_forward.1} parent=5 // pred_check_branch
        %220 = sbr.rel (%p217) target = $region12
      $region11: #{mrfnet_forward.1} parent=5 // pred_region
        %s221 = ssub.s32 %s13, 1
        // Predicated region
        $region13: #{mrfnet_forward.1} parent=11 // pred_check
          %p222 = pneg %p74
        $region14: #{mrfnet_forward.1} parent=11 // pred_check_branch
          %224 = sbr.rel (%p222) target = $region16
        $region15: #{mrfnet_forward.1} parent=11 // pred_region
          _
        $region16: #{mrfnet_forward.1} parent=11 // pred_fallthru
          _
        // Predicated region
        $region17: #{mrfnet_forward.1} parent=11 // pred_check
          %p225 = pneg %p95
        $region18: #{mrfnet_forward.1} parent=11 // pred_check_branch
          %227 = sbr.rel (%p225) target = $region20
        $region19: #{mrfnet_forward.1} parent=11 // pred_region
          _
        $region20: #{mrfnet_forward.1} parent=11 // pred_fallthru
          _
        // Predicated region
        $region21: #{mrfnet_forward.1} parent=11 // pred_check
          %p228 = pneg %p116
        $region22: #{mrfnet_forward.1} parent=11 // pred_check_branch
          %230 = sbr.rel (%p228) target = $region24
        $region23: #{mrfnet_forward.1} parent=11 // pred_region
          _
        $region24: #{mrfnet_forward.1} parent=11 // pred_fallthru
          _
        // Predicated region
        $region25: #{mrfnet_forward.1} parent=11 // pred_check
          %p231 = pneg %p137
        $region26: #{mrfnet_forward.1} parent=11 // pred_check_branch
          %233 = sbr.rel (%p231) target = $region28
        $region27: #{mrfnet_forward.1} parent=11 // pred_region
          _
        $region28: #{mrfnet_forward.1} parent=11 // pred_fallthru
          _
        // Predicated region
        $region29: #{mrfnet_forward.1} parent=11 // pred_check
          %p234 = pneg %p158
        $region30: #{mrfnet_forward.1} parent=11 // pred_check_branch
          %236 = sbr.rel (%p234) target = $region32
        $region31: #{mrfnet_forward.1} parent=11 // pred_region
          _
        $region32: #{mrfnet_forward.1} parent=11 // pred_fallthru
          _
        // Predicated region
        $region33: #{mrfnet_forward.1} parent=11 // pred_check
          %p237 = pneg %p179
        $region34: #{mrfnet_forward.1} parent=11 // pred_check_branch
          %239 = sbr.rel (%p237) target = $region36
        $region35: #{mrfnet_forward.1} parent=11 // pred_region
          _
        $region36: #{mrfnet_forward.1} parent=11 // pred_fallthru
          _
      $region12: #{mrfnet_forward.1} parent=5 // pred_fallthru
        _
      %p240 = scmp.lt.s32.totalorder %s13, 4
      // Predicated region
      $region37: #{mrfnet_forward.1} parent=5 // pred_check
        %p241 = pneg %p240
      $region38: #{mrfnet_forward.1} parent=5 // pred_check_branch
        %243 = sbr.rel (%p241) target = $region40
      $region39: #{mrfnet_forward.1} parent=5 // pred_region
        // Predicated region
        $region41: #{mrfnet_forward.1} parent=39 // pred_check
          %p244 = pneg %p47
        $region42: #{mrfnet_forward.1} parent=39 // pred_check_branch
          %246 = sbr.rel (%p244) target = $region44
        $region43: #{mrfnet_forward.1} parent=39 // pred_region
          %s247 = sand.u32 %s37, 1
          %s248 = sand.u32 %s37, 1
          %s249 = smul.addr %s248, 8
          %s250 = scalar_lea.vmem [#allocation2], %s249
          %s251 = smul.addr %s20, 4
          %s252 = sadd.s32 %s21, %s251
          %s253 = smul.addr %s252, 4
          %s254 = scalar_lea.vmem %s0, %s253
          // Predicated region
          $region45: #{mrfnet_forward.1} parent=43 // pred_check
            _
          $region46: #{mrfnet_forward.1} parent=43 // pred_check_branch
            %256 = sbr.rel (0) target = $region48
          $region47: #{mrfnet_forward.1} parent=43 // pred_region
            // Predicated region
            $region49: #{mrfnet_forward.1} parent=47 // pred_check
              _
            $region50: #{mrfnet_forward.1} parent=47 // pred_check_branch
              %258 = sbr.rel target = $region52
            $region51: #{mrfnet_forward.1} parent=47 // pred_region
              // Predicated region
              $region64: #{mrfnet_forward.1} parent=51 // pred_check
                _
              $region65: #{mrfnet_forward.1} parent=51 // pred_check_branch
                %275 = sbr.rel (0) target = $region67
              $region66: #{mrfnet_forward.1} parent=51 // pred_region
                loop: start=0, step=1, limit=1
                $region68: #{mrfnet_forward.1} parent=66 // loop_pre_header
                  _
                $region69: #{mrfnet_forward.1} parent=66 // loop_header
                  %s277 = sphi 0, %s281
                  %p278 = scmp.ge.s32.totalorder %s277, 1
                  %s282 = sphi %s254, %s254
                  %s283 = sphi %s250, %s250
                $region70: #{mrfnet_forward.1} parent=66 // loop_header_branch
                  %280 = sbr.rel (%p278) target = $region74
                $region71: #{mrfnet_forward.1} parent=66 // loop_body
                  _
                $region72: #{mrfnet_forward.1} parent=66 // loop_footer
                  %s281 = sadd.s32 1, %s277
                $region73: #{mrfnet_forward.1} parent=66 // loop_footer_branch
                  %276 = sbr.rel target = $region69
                $region74: #{mrfnet_forward.1} parent=66 // loop_exit
                  _
                loop: start=0, step=1, limit=1
                $region75: #{mrfnet_forward.1} parent=66 // loop_pre_header
                  _
                $region76: #{mrfnet_forward.1} parent=66 // loop_header
                  %s286 = sphi 0, %s290
                  %p287 = scmp.ge.s32.totalorder %s286, 1
                  %s291 = sphi %s254, %s254
                  %s292 = sphi %s250, %s250
                $region77: #{mrfnet_forward.1} parent=66 // loop_header_branch
                  %289 = sbr.rel (%p287) target = $region81
                $region78: #{mrfnet_forward.1} parent=66 // loop_body
                  %v293 = vld [vmem:[%s291] sm:$0xf]
                  %294 = vst [vmem:[%s292] sm:$0xf] %v293
                  %v295 = vld [vmem:[%s291 + $0x8] sm:$0xf]
                  %296 = vst [vmem:[%s292 + $0x4] sm:$0xf] %v295
                $region79: #{mrfnet_forward.1} parent=66 // loop_footer
                  %s290 = sadd.s32 1, %s286
                $region80: #{mrfnet_forward.1} parent=66 // loop_footer_branch
                  %285 = sbr.rel target = $region76
                $region81: #{mrfnet_forward.1} parent=66 // loop_exit
                  _
              $region67: #{mrfnet_forward.1} parent=51 // pred_fallthru
                _
            $region52: #{mrfnet_forward.1} parent=47 // pred_fallthru
              _
            // Predicated region
            $region53: #{mrfnet_forward.1} parent=47 // pred_check
              _
            $region54: #{mrfnet_forward.1} parent=47 // pred_check_branch
              %260 = sbr.rel (0) target = $region56
            $region55: #{mrfnet_forward.1} parent=47 // pred_region
              loop: start=0, step=1, limit=1
              $region57: #{mrfnet_forward.1} parent=55 // loop_pre_header
                _
              $region58: #{mrfnet_forward.1} parent=55 // loop_header
                %s263 = sphi 0, %s267
                %p264 = scmp.ge.s32.totalorder %s263, 1
                %s268 = sphi %s254, %s254
                %s269 = sphi %s250, %s250
              $region59: #{mrfnet_forward.1} parent=55 // loop_header_branch
                %266 = sbr.rel (%p264) target = $region63
              $region60: #{mrfnet_forward.1} parent=55 // loop_body
                %v270 = vld [vmem:[%s268] sm:$0xf]
                %271 = vst [vmem:[%s269] sm:$0xf] %v270
                %v272 = vld [vmem:[%s268 + $0x8] sm:$0xf]
                %273 = vst [vmem:[%s269 + $0x4] sm:$0xf] %v272
              $region61: #{mrfnet_forward.1} parent=55 // loop_footer
                %s267 = sadd.s32 1, %s263
              $region62: #{mrfnet_forward.1} parent=55 // loop_footer_branch
                %262 = sbr.rel target = $region58
              $region63: #{mrfnet_forward.1} parent=55 // loop_exit
                _
            $region56: #{mrfnet_forward.1} parent=47 // pred_fallthru
              _
          $region48: #{mrfnet_forward.1} parent=43 // pred_fallthru
            _
          %297 = vnop
        $region44: #{mrfnet_forward.1} parent=39 // pred_fallthru
          _
      $region40: #{mrfnet_forward.1} parent=5 // pred_fallthru
        _
      %p298 = scmp.le.s32.totalorder 1, %s13
      %p299 = scmp.lt.s32.totalorder %s13, 5
      %p300 = pnand %p298, %p299
      %p301 = pneg %p300
      // Predicated region
      $region82: #{mrfnet_forward.1} parent=5 // pred_check
        _
      $region83: #{mrfnet_forward.1} parent=5 // pred_check_branch
        %303 = sbr.rel (%p300) target = $region85
      $region84: #{mrfnet_forward.1} parent=5 // pred_region
        %s304 = ssub.s32 %s13, 1
        %s305 = sand.u32 %s40, 1
        %s306 = sand.u32 %s40, 1
        %s307 = smul.addr %s306, 8
        %s308 = scalar_lea.vmem [#allocation2], %s307
        // Predicated region
        $region86: #{mrfnet_forward.1} parent=84 // pred_check
          %p309 = pneg %p53
        $region87: #{mrfnet_forward.1} parent=84 // pred_check_branch
          %311 = sbr.rel (%p309) target = $region89
        $region88: #{mrfnet_forward.1} parent=84 // pred_region
          _
        $region89: #{mrfnet_forward.1} parent=84 // pred_fallthru
          _
        %s312 = sand.u32 %s40, 1
        %s313 = sand.u32 %s40, 1
        %s314 = smul.addr %s313, 8
        %s315 = scalar_lea.vmem [#allocation2], %s314
        %p316 = pneg %p53
        %p317 = pneg %p50
        %p318 = pneg %p74
        %p319 = pneg %p71
        %p320 = pneg %p95
        %p321 = pneg %p92
        %p322 = pneg %p116
        %p323 = pneg %p113
        %p324 = pneg %p137
        %p325 = pneg %p134
        %p326 = pneg %p158
        %p327 = pneg %p155
        %p328 = pneg %p179
        %p329 = pneg %p176
        %p330 = pneg %p207
        %p331 = pneg %p204
        %s332 = sand.u32 %s194, 1
        %s333 = sand.u32 %s194, 1
        %s334 = smul.addr %s333, 16
        %s335 = scalar_lea.vmem [#allocation3], %s334
        %v337 = vld [vmem:[%s308] sm:$0xf]
        %v338 = vld [vmem:[%s308 + $0x4] sm:$0xf]
        %v339 = vld [vmem:[%s1] sm:$0xf]
        %v340 = vld [vmem:[%s1 + $0x4] sm:$0xf]
        %v341 = vld [vmem:[%s1 + $0x8] sm:$0xf]
        %v342 = vld [vmem:[%s1 + $0xc] sm:$0xf]
        %v343 = vld [vmem:[%s1 + $0x10] sm:$0xf]
        %v344 = vld [vmem:[%s1 + $0x14] sm:$0xf]
        %v345 = vld [vmem:[%s1 + $0x18] sm:$0xf]
        %v346 = vld [vmem:[%s1 + $0x1c] sm:$0xf]
        %v347 = vld [vmem:[%s1 + $0x20] sm:$0xf]
        %v348 = vld [vmem:[%s1 + $0x24] sm:$0xf]
        %v349 = vld [vmem:[%s1 + $0x28] sm:$0xf]
        %v350 = vld [vmem:[%s1 + $0x2c] sm:$0xf]
        %v351 = vld [vmem:[%s1 + $0x30] sm:$0xf]
        %v352 = vld [vmem:[%s1 + $0x34] sm:$0xf]
        %v353 = vld [vmem:[%s1 + $0x38] sm:$0xf]
        %v354 = vld [vmem:[%s1 + $0x3c] sm:$0xf]
        %v355 = vld [vmem:[%s1 + $0x40] sm:$0xf]
        %v356 = vld [vmem:[%s1 + $0x44] sm:$0xf]
        %v357 = vld [vmem:[%s1 + $0x48] sm:$0xf]
        %v358 = vld [vmem:[%s1 + $0x4c] sm:$0xf]
        %v359 = vld [vmem:[%s1 + $0x50] sm:$0xf]
        %v360 = vld [vmem:[%s1 + $0x54] sm:$0xf]
        %v361 = vld [vmem:[%s1 + $0x58] sm:$0xf]
        %v362 = vld [vmem:[%s1 + $0x5c] sm:$0xf]
        %v363 = vld [vmem:[%s1 + $0x60] sm:$0xf]
        %v364 = vld [vmem:[%s1 + $0x64] sm:$0xf]
        %v365 = vld [vmem:[%s1 + $0x68] sm:$0xf]
        %v366 = vld [vmem:[%s1 + $0x6c] sm:$0xf]
        %v367 = vld [vmem:[%s1 + $0x70] sm:$0xf]
        %v368 = vld [vmem:[%s1 + $0x74] sm:$0xf]
        %v369 = vld [vmem:[%s1 + $0x78] sm:$0xf]
        %v370 = vld [vmem:[%s1 + $0x7c] sm:$0xf]
        %v371 = vld [vmem:[%s1 + $0x80] sm:$0xf]
        %v372 = vld [vmem:[%s1 + $0x84] sm:$0xf]
        %v373 = vld [vmem:[%s1 + $0x88] sm:$0xf]
        %v374 = vld [vmem:[%s1 + $0x8c] sm:$0xf]
        %v375 = vld [vmem:[%s1 + $0x90] sm:$0xf]
        %v376 = vld [vmem:[%s1 + $0x94] sm:$0xf]
        %v377 = vld [vmem:[%s1 + $0x98] sm:$0xf]
        %v378 = vld [vmem:[%s1 + $0x9c] sm:$0xf]
        %v379 = vld [vmem:[%s1 + $0xa0] sm:$0xf]
        %v380 = vld [vmem:[%s1 + $0xa4] sm:$0xf]
        %v381 = vld [vmem:[%s1 + $0xa8] sm:$0xf]
        %v382 = vld [vmem:[%s1 + $0xac] sm:$0xf]
        %v383 = vld [vmem:[%s1 + $0xb0] sm:$0xf]
        %v384 = vld [vmem:[%s1 + $0xb4] sm:$0xf]
        %v385 = vld [vmem:[%s1 + $0xb8] sm:$0xf]
        %v386 = vld [vmem:[%s1 + $0xbc] sm:$0xf]
        %v387 = vld [vmem:[%s1 + $0xc0] sm:$0xf]
        %v388 = vld [vmem:[%s1 + $0xc4] sm:$0xf]
        %v389 = vld [vmem:[%s1 + $0xc8] sm:$0xf]
        %v390 = vld [vmem:[%s1 + $0xcc] sm:$0xf]
        %v391 = vld [vmem:[%s1 + $0xd0] sm:$0xf]
        %v392 = vld [vmem:[%s1 + $0xd4] sm:$0xf]
        %v393 = vld [vmem:[%s1 + $0xd8] sm:$0xf]
        %v394 = vld [vmem:[%s1 + $0xdc] sm:$0xf]
        %v395 = vld [vmem:[%s1 + $0xe0] sm:$0xf]
        %v396 = vld [vmem:[%s1 + $0xe4] sm:$0xf]
        %v397 = vld [vmem:[%s1 + $0xe8] sm:$0xf]
        %v398 = vld [vmem:[%s1 + $0xec] sm:$0xf]
        %v399 = vld [vmem:[%s1 + $0xf0] sm:$0xf]
        %v400 = vld [vmem:[%s1 + $0xf4] sm:$0xf]
        %v401 = vld [vmem:[%s1 + $0xf8] sm:$0xf]
        %v402 = vld [vmem:[%s1 + $0xfc] sm:$0xf]
        %v403 = vld [vmem:[%s2] sm:$0xff]
        %v404 = vld [vmem:[%s2 + $0x8] sm:$0xff]
        %v405 = vld [vmem:[%s2 + $0x10] sm:$0xff]
        %v406 = vld [vmem:[%s2 + $0x18] sm:$0xff]
        %v407 = vld [vmem:[%s2 + $0x20] sm:$0xff]
        %v408 = vld [vmem:[%s2 + $0x28] sm:$0xff]
        %v409 = vld [vmem:[%s2 + $0x30] sm:$0xff]
        %v410 = vld [vmem:[%s2 + $0x38] sm:$0xff]
        %v411 = vld [vmem:[%s2 + $0x40] sm:$0xff]
        %v412 = vld [vmem:[%s2 + $0x48] sm:$0xff]
        %v413 = vld [vmem:[%s2 + $0x50] sm:$0xff]
        %v414 = vld [vmem:[%s2 + $0x58] sm:$0xff]
        %v415 = vld [vmem:[%s2 + $0x60] sm:$0xff]
        %v416 = vld [vmem:[%s2 + $0x68] sm:$0xff]
        %v417 = vld [vmem:[%s2 + $0x70] sm:$0xff]
        %v418 = vld [vmem:[%s2 + $0x78] sm:$0xff]
        %v419 = vld [vmem:[%s2 + $0x80] sm:$0xff]
        %v420 = vld [vmem:[%s2 + $0x88] sm:$0xff]
        %v421 = vld [vmem:[%s2 + $0x90] sm:$0xff]
        %v422 = vld [vmem:[%s2 + $0x98] sm:$0xff]
        %v423 = vld [vmem:[%s2 + $0xa0] sm:$0xff]
        %v424 = vld [vmem:[%s2 + $0xa8] sm:$0xff]
        %v425 = vld [vmem:[%s2 + $0xb0] sm:$0xff]
        %v426 = vld [vmem:[%s2 + $0xb8] sm:$0xff]
        %v427 = vld [vmem:[%s2 + $0xc0] sm:$0xff]
        %v428 = vld [vmem:[%s2 + $0xc8] sm:$0xff]
        %v429 = vld [vmem:[%s2 + $0xd0] sm:$0xff]
        %v430 = vld [vmem:[%s2 + $0xd8] sm:$0xff]
        %v431 = vld [vmem:[%s2 + $0xe0] sm:$0xff]
        %v432 = vld [vmem:[%s2 + $0xe8] sm:$0xff]
        %v433 = vld [vmem:[%s2 + $0xf0] sm:$0xff]
        %v434 = vld [vmem:[%s2 + $0xf8] sm:$0xff]
        %v435 = vld [vmem:[%s2 + $0x100] sm:$0xff]
        %v436 = vld [vmem:[%s2 + $0x108] sm:$0xff]
        %v437 = vld [vmem:[%s2 + $0x110] sm:$0xff]
        %v438 = vld [vmem:[%s2 + $0x118] sm:$0xff]
        %v439 = vld [vmem:[%s2 + $0x120] sm:$0xff]
        %v440 = vld [vmem:[%s2 + $0x128] sm:$0xff]
        %v441 = vld [vmem:[%s2 + $0x130] sm:$0xff]
        %v442 = vld [vmem:[%s2 + $0x138] sm:$0xff]
        %v443 = vld [vmem:[%s2 + $0x140] sm:$0xff]
        %v444 = vld [vmem:[%s2 + $0x148] sm:$0xff]
        %v445 = vld [vmem:[%s2 + $0x150] sm:$0xff]
        %v446 = vld [vmem:[%s2 + $0x158] sm:$0xff]
        %v447 = vld [vmem:[%s2 + $0x160] sm:$0xff]
        %v448 = vld [vmem:[%s2 + $0x168] sm:$0xff]
        %v449 = vld [vmem:[%s2 + $0x170] sm:$0xff]
        %v450 = vld [vmem:[%s2 + $0x178] sm:$0xff]
        %v451 = vld [vmem:[%s2 + $0x180] sm:$0xff]
        %v452 = vld [vmem:[%s2 + $0x188] sm:$0xff]
        %v453 = vld [vmem:[%s2 + $0x190] sm:$0xff]
        %v454 = vld [vmem:[%s2 + $0x198] sm:$0xff]
        %v455 = vld [vmem:[%s2 + $0x1a0] sm:$0xff]
        %v456 = vld [vmem:[%s2 + $0x1a8] sm:$0xff]
        %v457 = vld [vmem:[%s2 + $0x1b0] sm:$0xff]
        %v458 = vld [vmem:[%s2 + $0x1b8] sm:$0xff]
        %v459 = vld [vmem:[%s2 + $0x1c0] sm:$0xff]
        %v460 = vld [vmem:[%s2 + $0x1c8] sm:$0xff]
        %v461 = vld [vmem:[%s2 + $0x1d0] sm:$0xff]
        %v462 = vld [vmem:[%s2 + $0x1d8] sm:$0xff]
        %v463 = vld [vmem:[%s2 + $0x1e0] sm:$0xff]
        %v464 = vld [vmem:[%s2 + $0x1e8] sm:$0xff]
        %v465 = vld [vmem:[%s2 + $0x1f0] sm:$0xff]
        %v466 = vld [vmem:[%s2 + $0x1f8] sm:$0xff]
        %468 = vset.pattern.permute.xlu0 0
        %469 = vperm.xlu0 %468, %v403
        %v470 = vpop.permute.xlu0 %469
        %473 = vset.pattern.permute.xlu0 0
        %474 = vperm.xlu0 %473, %v404
        %v475 = vpop.permute.xlu0 %474
        %478 = vset.pattern.permute.xlu0 0
        %479 = vperm.xlu0 %478, %v405
        %v480 = vpop.permute.xlu0 %479
        %483 = vset.pattern.permute.xlu0 0
        %484 = vperm.xlu0 %483, %v406
        %v485 = vpop.permute.xlu0 %484
        %488 = vset.pattern.permute.xlu0 0
        %489 = vperm.xlu0 %488, %v407
        %v490 = vpop.permute.xlu0 %489
        %493 = vset.pattern.permute.xlu0 0
        %494 = vperm.xlu0 %493, %v408
        %v495 = vpop.permute.xlu0 %494
        %498 = vset.pattern.permute.xlu0 0
        %499 = vperm.xlu0 %498, %v409
        %v500 = vpop.permute.xlu0 %499
        %503 = vset.pattern.permute.xlu0 0
        %504 = vperm.xlu0 %503, %v410
        %v505 = vpop.permute.xlu0 %504
        %508 = vset.pattern.permute.xlu0 0
        %509 = vperm.xlu0 %508, %v411
        %v510 = vpop.permute.xlu0 %509
        %513 = vset.pattern.permute.xlu0 0
        %514 = vperm.xlu0 %513, %v412
        %v515 = vpop.permute.xlu0 %514
        %518 = vset.pattern.permute.xlu0 0
        %519 = vperm.xlu0 %518, %v413
        %v520 = vpop.permute.xlu0 %519
        %523 = vset.pattern.permute.xlu0 0
        %524 = vperm.xlu0 %523, %v414
        %v525 = vpop.permute.xlu0 %524
        %528 = vset.pattern.permute.xlu0 0
        %529 = vperm.xlu0 %528, %v415
        %v530 = vpop.permute.xlu0 %529
        %533 = vset.pattern.permute.xlu0 0
        %534 = vperm.xlu0 %533, %v416
        %v535 = vpop.permute.xlu0 %534
        %538 = vset.pattern.permute.xlu0 0
        %539 = vperm.xlu0 %538, %v417
        %v540 = vpop.permute.xlu0 %539
        %543 = vset.pattern.permute.xlu0 0
        %544 = vperm.xlu0 %543, %v418
        %v545 = vpop.permute.xlu0 %544
        %548 = vset.pattern.permute.xlu0 0
        %549 = vperm.xlu0 %548, %v419
        %v550 = vpop.permute.xlu0 %549
        %553 = vset.pattern.permute.xlu0 0
        %554 = vperm.xlu0 %553, %v420
        %v555 = vpop.permute.xlu0 %554
        %558 = vset.pattern.permute.xlu0 0
        %559 = vperm.xlu0 %558, %v421
        %v560 = vpop.permute.xlu0 %559
        %563 = vset.pattern.permute.xlu0 0
        %564 = vperm.xlu0 %563, %v422
        %v565 = vpop.permute.xlu0 %564
        %568 = vset.pattern.permute.xlu0 0
        %569 = vperm.xlu0 %568, %v423
        %v570 = vpop.permute.xlu0 %569
        %573 = vset.pattern.permute.xlu0 0
        %574 = vperm.xlu0 %573, %v424
        %v575 = vpop.permute.xlu0 %574
        %578 = vset.pattern.permute.xlu0 0
        %579 = vperm.xlu0 %578, %v425
        %v580 = vpop.permute.xlu0 %579
        %583 = vset.pattern.permute.xlu0 0
        %584 = vperm.xlu0 %583, %v426
        %v585 = vpop.permute.xlu0 %584
        %588 = vset.pattern.permute.xlu0 0
        %589 = vperm.xlu0 %588, %v427
        %v590 = vpop.permute.xlu0 %589
        %593 = vset.pattern.permute.xlu0 0
        %594 = vperm.xlu0 %593, %v428
        %v595 = vpop.permute.xlu0 %594
        %598 = vset.pattern.permute.xlu0 0
        %599 = vperm.xlu0 %598, %v429
        %v600 = vpop.permute.xlu0 %599
        %603 = vset.pattern.permute.xlu0 0
        %604 = vperm.xlu0 %603, %v430
        %v605 = vpop.permute.xlu0 %604
        %608 = vset.pattern.permute.xlu0 0
        %609 = vperm.xlu0 %608, %v431
        %v610 = vpop.permute.xlu0 %609
        %613 = vset.pattern.permute.xlu0 0
        %614 = vperm.xlu0 %613, %v432
        %v615 = vpop.permute.xlu0 %614
        %618 = vset.pattern.permute.xlu0 0
        %619 = vperm.xlu0 %618, %v433
        %v620 = vpop.permute.xlu0 %619
        %623 = vset.pattern.permute.xlu0 0
        %624 = vperm.xlu0 %623, %v434
        %v625 = vpop.permute.xlu0 %624
        %628 = vset.pattern.permute.xlu0 0
        %629 = vperm.xlu0 %628, %v435
        %v630 = vpop.permute.xlu0 %629
        %633 = vset.pattern.permute.xlu0 0
        %634 = vperm.xlu0 %633, %v436
        %v635 = vpop.permute.xlu0 %634
        %638 = vset.pattern.permute.xlu0 0
        %639 = vperm.xlu0 %638, %v437
        %v640 = vpop.permute.xlu0 %639
        %643 = vset.pattern.permute.xlu0 0
        %644 = vperm.xlu0 %643, %v438
        %v645 = vpop.permute.xlu0 %644
        %648 = vset.pattern.permute.xlu0 0
        %649 = vperm.xlu0 %648, %v439
        %v650 = vpop.permute.xlu0 %649
        %653 = vset.pattern.permute.xlu0 0
        %654 = vperm.xlu0 %653, %v440
        %v655 = vpop.permute.xlu0 %654
        %658 = vset.pattern.permute.xlu0 0
        %659 = vperm.xlu0 %658, %v441
        %v660 = vpop.permute.xlu0 %659
        %663 = vset.pattern.permute.xlu0 0
        %664 = vperm.xlu0 %663, %v442
        %v665 = vpop.permute.xlu0 %664
        %668 = vset.pattern.permute.xlu0 0
        %669 = vperm.xlu0 %668, %v443
        %v670 = vpop.permute.xlu0 %669
        %673 = vset.pattern.permute.xlu0 0
        %674 = vperm.xlu0 %673, %v444
        %v675 = vpop.permute.xlu0 %674
        %678 = vset.pattern.permute.xlu0 0
        %679 = vperm.xlu0 %678, %v445
        %v680 = vpop.permute.xlu0 %679
        %683 = vset.pattern.permute.xlu0 0
        %684 = vperm.xlu0 %683, %v446
        %v685 = vpop.permute.xlu0 %684
        %688 = vset.pattern.permute.xlu0 0
        %689 = vperm.xlu0 %688, %v447
        %v690 = vpop.permute.xlu0 %689
        %693 = vset.pattern.permute.xlu0 0
        %694 = vperm.xlu0 %693, %v448
        %v695 = vpop.permute.xlu0 %694
        %698 = vset.pattern.permute.xlu0 0
        %699 = vperm.xlu0 %698, %v449
        %v700 = vpop.permute.xlu0 %699
        %703 = vset.pattern.permute.xlu0 0
        %704 = vperm.xlu0 %703, %v450
        %v705 = vpop.permute.xlu0 %704
        %708 = vset.pattern.permute.xlu0 0
        %709 = vperm.xlu0 %708, %v451
        %v710 = vpop.permute.xlu0 %709
        %713 = vset.pattern.permute.xlu0 0
        %714 = vperm.xlu0 %713, %v452
        %v715 = vpop.permute.xlu0 %714
        %718 = vset.pattern.permute.xlu0 0
        %719 = vperm.xlu0 %718, %v453
        %v720 = vpop.permute.xlu0 %719
        %723 = vset.pattern.permute.xlu0 0
        %724 = vperm.xlu0 %723, %v454
        %v725 = vpop.permute.xlu0 %724
        %728 = vset.pattern.permute.xlu0 0
        %729 = vperm.xlu0 %728, %v455
        %v730 = vpop.permute.xlu0 %729
        %733 = vset.pattern.permute.xlu0 0
        %734 = vperm.xlu0 %733, %v456
        %v735 = vpop.permute.xlu0 %734
        %738 = vset.pattern.permute.xlu0 0
        %739 = vperm.xlu0 %738, %v457
        %v740 = vpop.permute.xlu0 %739
        %743 = vset.pattern.permute.xlu0 0
        %744 = vperm.xlu0 %743, %v458
        %v745 = vpop.permute.xlu0 %744
        %748 = vset.pattern.permute.xlu0 0
        %749 = vperm.xlu0 %748, %v459
        %v750 = vpop.permute.xlu0 %749
        %753 = vset.pattern.permute.xlu0 0
        %754 = vperm.xlu0 %753, %v460
        %v755 = vpop.permute.xlu0 %754
        %758 = vset.pattern.permute.xlu0 0
        %759 = vperm.xlu0 %758, %v461
        %v760 = vpop.permute.xlu0 %759
        %763 = vset.pattern.permute.xlu0 0
        %764 = vperm.xlu0 %763, %v462
        %v765 = vpop.permute.xlu0 %764
        %768 = vset.pattern.permute.xlu0 0
        %769 = vperm.xlu0 %768, %v463
        %v770 = vpop.permute.xlu0 %769
        %773 = vset.pattern.permute.xlu0 0
        %774 = vperm.xlu0 %773, %v464
        %v775 = vpop.permute.xlu0 %774
        %778 = vset.pattern.permute.xlu0 0
        %779 = vperm.xlu0 %778, %v465
        %v780 = vpop.permute.xlu0 %779
        %783 = vset.pattern.permute.xlu0 0
        %784 = vperm.xlu0 %783, %v466
        %v785 = vpop.permute.xlu0 %784
        %v851 = vunpack.c.l.b16 %v339
        %v852 = vunpack.c.l.b16 %v340
        %v853 = vunpack.c.l.b16 %v341
        %v854 = vunpack.c.l.b16 %v342
        %v855 = vunpack.c.l.b16 %v343
        %v856 = vunpack.c.l.b16 %v344
        %v857 = vunpack.c.l.b16 %v345
        %v858 = vunpack.c.l.b16 %v346
        %v859 = vunpack.c.l.b16 %v347
        %v860 = vunpack.c.l.b16 %v348
        %v861 = vunpack.c.l.b16 %v349
        %v862 = vunpack.c.l.b16 %v350
        %v863 = vunpack.c.l.b16 %v351
        %v864 = vunpack.c.l.b16 %v352
        %v865 = vunpack.c.l.b16 %v353
        %v866 = vunpack.c.l.b16 %v354
        %v867 = vunpack.c.l.b16 %v355
        %v868 = vunpack.c.l.b16 %v356
        %v869 = vunpack.c.l.b16 %v357
        %v870 = vunpack.c.l.b16 %v358
        %v871 = vunpack.c.l.b16 %v359
        %v872 = vunpack.c.l.b16 %v360
        %v873 = vunpack.c.l.b16 %v361
        %v874 = vunpack.c.l.b16 %v362
        %v875 = vunpack.c.l.b16 %v363
        %v876 = vunpack.c.l.b16 %v364
        %v877 = vunpack.c.l.b16 %v365
        %v878 = vunpack.c.l.b16 %v366
        %v879 = vunpack.c.l.b16 %v367
        %v880 = vunpack.c.l.b16 %v368
        %v881 = vunpack.c.l.b16 %v369
        %v882 = vunpack.c.l.b16 %v370
        %v883 = vunpack.c.l.b16 %v371
        %v884 = vunpack.c.l.b16 %v372
        %v885 = vunpack.c.l.b16 %v373
        %v886 = vunpack.c.l.b16 %v374
        %v887 = vunpack.c.l.b16 %v375
        %v888 = vunpack.c.l.b16 %v376
        %v889 = vunpack.c.l.b16 %v377
        %v890 = vunpack.c.l.b16 %v378
        %v891 = vunpack.c.l.b16 %v379
        %v892 = vunpack.c.l.b16 %v380
        %v893 = vunpack.c.l.b16 %v381
        %v894 = vunpack.c.l.b16 %v382
        %v895 = vunpack.c.l.b16 %v383
        %v896 = vunpack.c.l.b16 %v384
        %v897 = vunpack.c.l.b16 %v385
        %v898 = vunpack.c.l.b16 %v386
        %v899 = vunpack.c.l.b16 %v387
        %v900 = vunpack.c.l.b16 %v388
        %v901 = vunpack.c.l.b16 %v389
        %v902 = vunpack.c.l.b16 %v390
        %v903 = vunpack.c.l.b16 %v391
        %v904 = vunpack.c.l.b16 %v392
        %v905 = vunpack.c.l.b16 %v393
        %v906 = vunpack.c.l.b16 %v394
        %v907 = vunpack.c.l.b16 %v395
        %v908 = vunpack.c.l.b16 %v396
        %v909 = vunpack.c.l.b16 %v397
        %v910 = vunpack.c.l.b16 %v398
        %v911 = vunpack.c.l.b16 %v399
        %v912 = vunpack.c.l.b16 %v400
        %v913 = vunpack.c.l.b16 %v401
        %v914 = vunpack.c.l.b16 %v402
        %v915 = vpack.c.b16 %v852, %v851
        %v916 = vpack.c.b16 %v854, %v853
        %v917 = vpack.c.b16 %v856, %v855
        %v918 = vpack.c.b16 %v858, %v857
        %v919 = vpack.c.b16 %v860, %v859
        %v920 = vpack.c.b16 %v862, %v861
        %v921 = vpack.c.b16 %v864, %v863
        %v922 = vpack.c.b16 %v866, %v865
        %v923 = vpack.c.b16 %v868, %v867
        %v924 = vpack.c.b16 %v870, %v869
        %v925 = vpack.c.b16 %v872, %v871
        %v926 = vpack.c.b16 %v874, %v873
        %v927 = vpack.c.b16 %v876, %v875
        %v928 = vpack.c.b16 %v878, %v877
        %v929 = vpack.c.b16 %v880, %v879
        %v930 = vpack.c.b16 %v882, %v881
        %v931 = vpack.c.b16 %v884, %v883
        %v932 = vpack.c.b16 %v886, %v885
        %v933 = vpack.c.b16 %v888, %v887
        %v934 = vpack.c.b16 %v890, %v889
        %v935 = vpack.c.b16 %v892, %v891
        %v936 = vpack.c.b16 %v894, %v893
        %v937 = vpack.c.b16 %v896, %v895
        %v938 = vpack.c.b16 %v898, %v897
        %v939 = vpack.c.b16 %v900, %v899
        %v940 = vpack.c.b16 %v902, %v901
        %v941 = vpack.c.b16 %v904, %v903
        %v942 = vpack.c.b16 %v906, %v905
        %v943 = vpack.c.b16 %v908, %v907
        %v944 = vpack.c.b16 %v910, %v909
        %v945 = vpack.c.b16 %v912, %v911
        %v946 = vpack.c.b16 %v914, %v913
        %v949 = vunpack.c.l.b16 %v337
        %v950 = vunpack.c.l.b16 %v338
        %v951 = vpack.c.b16 %v950, %v949
        %vm953 = vcmask 130048
        %v955 = vsel %vm953, %v915, 0
        %v958 = vsel %vm953, %v916, 0
        %v961 = vsel %vm953, %v917, 0
        %v964 = vsel %vm953, %v918, 0
        %v967 = vsel %vm953, %v919, 0
        %v970 = vsel %vm953, %v920, 0
        %v973 = vsel %vm953, %v921, 0
        %v976 = vsel %vm953, %v922, 0
        %v979 = vsel %vm953, %v923, 0
        %v982 = vsel %vm953, %v924, 0
        %v985 = vsel %vm953, %v925, 0
        %v988 = vsel %vm953, %v926, 0
        %v991 = vsel %vm953, %v927, 0
        %v994 = vsel %vm953, %v928, 0
        %v997 = vsel %vm953, %v929, 0
        %v1000 = vsel %vm953, %v930, 0
        %v1003 = vsel %vm953, %v931, 0
        %v1006 = vsel %vm953, %v932, 0
        %v1009 = vsel %vm953, %v933, 0
        %v1012 = vsel %vm953, %v934, 0
        %v1015 = vsel %vm953, %v935, 0
        %v1018 = vsel %vm953, %v936, 0
        %v1021 = vsel %vm953, %v937, 0
        %v1024 = vsel %vm953, %v938, 0
        %v1027 = vsel %vm953, %v939, 0
        %v1030 = vsel %vm953, %v940, 0
        %v1033 = vsel %vm953, %v941, 0
        %v1036 = vsel %vm953, %v942, 0
        %v1039 = vsel %vm953, %v943, 0
        %v1042 = vsel %vm953, %v944, 0
        %v1045 = vsel %vm953, %v945, 0
        %v1048 = vsel %vm953, %v946, 0
        %1050 = vmatprep.subr.bf16.mxu0 0
        %1051 = vmatpush1.bf16.msra.mxu0 %v951
        %1052 = vmatprep.subr.bf16.mxu0 0
        %1053 = vmatpush1.bf16.msra.mxu0 0
        %1054 = vmatprep.subr.bf16.mxu0 0
        %1055 = vmatpush1.bf16.msra.mxu0 0
        %1056 = vmatprep.subr.bf16.mxu0 0
        %1057 = vmatpush1.bf16.msra.mxu0 0
        %1058 = vmatprep.subr.bf16.mxu0 0
        %1059 = vmatpush1.bf16.msra.mxu0 0
        %1060 = vmatprep.subr.bf16.mxu0 0
        %1061 = vmatpush1.bf16.msra.mxu0 0
        %1062 = vmatprep.subr.bf16.mxu0 0
        %1063 = vmatpush1.bf16.msra.mxu0 0
        %1064 = vmatprep.subr.bf16.mxu0 0
        %1065 = vmatpush1.bf16.msra.mxu0 0
        %1066 = vmatprep.subr.bf16.mxu0 0
        %1067 = vmatpush1.bf16.msra.mxu0 0
        %1068 = vmatprep.subr.bf16.mxu0 0
        %1069 = vmatpush1.bf16.msra.mxu0 0
        %1070 = vmatprep.subr.bf16.mxu0 0
        %1071 = vmatpush1.bf16.msra.mxu0 0
        %1072 = vmatprep.subr.bf16.mxu0 0
        %1073 = vmatpush1.bf16.msra.mxu0 0
        %1074 = vmatprep.subr.bf16.mxu0 0
        %1075 = vmatpush1.bf16.msra.mxu0 0
        %1076 = vmatprep.subr.bf16.mxu0 0
        %1077 = vmatpush1.bf16.msra.mxu0 0
        %1078 = vmatprep.subr.bf16.mxu0 0
        %1079 = vmatpush1.bf16.msra.mxu0 0
        %1080 = vmatprep.subr.bf16.mxu0 0
        %1081 = vmatpush1.bf16.msra.mxu0 0
        %1082 = vmatprep.mubr.bf16.mxu0 0
        %1083 = vmatmul.mubr.bf16.gmra.mrb[0].mxu0 %v955
        %v1084 = vpop.f32.mrb[0].mxu0
        %v1085 = vadd.f32 %v470, %v1084
        %v1086 = vpop.f32.mrb[0].mxu0
        %v1087 = vpop.f32.mrb[0].mxu0
        %v1088 = vadd.f32 %v475, %v1087
        %v1089 = vpop.f32.mrb[0].mxu0
        %1090 = vmatprep.mubr.bf16.mxu0 0
        %1091 = vmatmul.mubr.bf16.gmra.mrb[0].mxu0 %v958
        %v1092 = vpop.f32.mrb[0].mxu0
        %v1093 = vadd.f32 %v480, %v1092
        %v1094 = vpop.f32.mrb[0].mxu0
        %v1095 = vpop.f32.mrb[0].mxu0
        %v1096 = vadd.f32 %v485, %v1095
        %v1097 = vpop.f32.mrb[0].mxu0
        %1098 = vmatprep.mubr.bf16.mxu0 0
        %1099 = vmatmul.mubr.bf16.gmra.mrb[0].mxu0 %v961
        %v1100 = vpop.f32.mrb[0].mxu0
        %v1101 = vadd.f32 %v490, %v1100
        %v1102 = vpop.f32.mrb[0].mxu0
        %v1103 = vpop.f32.mrb[0].mxu0
        %v1104 = vadd.f32 %v495, %v1103
        %v1105 = vpop.f32.mrb[0].mxu0
        %1106 = vmatprep.mubr.bf16.mxu0 0
        %1107 = vmatmul.mubr.bf16.gmra.mrb[0].mxu0 %v964
        %v1108 = vpop.f32.mrb[0].mxu0
        %v1109 = vadd.f32 %v500, %v1108
        %v1110 = vpop.f32.mrb[0].mxu0
        %v1111 = vpop.f32.mrb[0].mxu0
        %v1112 = vadd.f32 %v505, %v1111
        %v1113 = vpop.f32.mrb[0].mxu0
        %1114 = vmatprep.mubr.bf16.mxu0 0
        %1115 = vmatmul.mubr.bf16.gmra.mrb[0].mxu0 %v967
        %v1116 = vpop.f32.mrb[0].mxu0
        %v1117 = vadd.f32 %v510, %v1116
        %v1118 = vpop.f32.mrb[0].mxu0
        %v1119 = vpop.f32.mrb[0].mxu0
        %v1120 = vadd.f32 %v515, %v1119
        %v1121 = vpop.f32.mrb[0].mxu0
        %1122 = vmatprep.mubr.bf16.mxu0 0
        %1123 = vmatmul.mubr.bf16.gmra.mrb[0].mxu0 %v970
        %v1124 = vpop.f32.mrb[0].mxu0
        %v1125 = vadd.f32 %v520, %v1124
        %v1126 = vpop.f32.mrb[0].mxu0
        %v1127 = vpop.f32.mrb[0].mxu0
        %v1128 = vadd.f32 %v525, %v1127
        %v1129 = vpop.f32.mrb[0].mxu0
        %1130 = vmatprep.mubr.bf16.mxu0 0
        %1131 = vmatmul.mubr.bf16.gmra.mrb[0].mxu0 %v973
        %v1132 = vpop.f32.mrb[0].mxu0
        %v1133 = vadd.f32 %v530, %v1132
        %v1134 = vpop.f32.mrb[0].mxu0
        %v1135 = vpop.f32.mrb[0].mxu0
        %v1136 = vadd.f32 %v535, %v1135
        %v1137 = vpop.f32.mrb[0].mxu0
        %1138 = vmatprep.mubr.bf16.mxu0 0
        %1139 = vmatmul.mubr.bf16.gmra.mrb[0].mxu0 %v976
        %v1140 = vpop.f32.mrb[0].mxu0
        %v1141 = vadd.f32 %v540, %v1140
        %v1142 = vpop.f32.mrb[0].mxu0
        %v1143 = vpop.f32.mrb[0].mxu0
        %v1144 = vadd.f32 %v545, %v1143
        %v1145 = vpop.f32.mrb[0].mxu0
        %1146 = vmatprep.mubr.bf16.mxu0 0
        %1147 = vmatmul.mubr.bf16.gmra.mrb[0].mxu0 %v979
        %v1148 = vpop.f32.mrb[0].mxu0
        %v1149 = vadd.f32 %v550, %v1148
        %v1150 = vpop.f32.mrb[0].mxu0
        %v1151 = vpop.f32.mrb[0].mxu0
        %v1152 = vadd.f32 %v555, %v1151
        %v1153 = vpop.f32.mrb[0].mxu0
        %1154 = vmatprep.mubr.bf16.mxu0 0
        %1155 = vmatmul.mubr.bf16.gmra.mrb[0].mxu0 %v982
        %v1156 = vpop.f32.mrb[0].mxu0
        %v1157 = vadd.f32 %v560, %v1156
        %v1158 = vpop.f32.mrb[0].mxu0
        %v1159 = vpop.f32.mrb[0].mxu0
        %v1160 = vadd.f32 %v565, %v1159
        %v1161 = vpop.f32.mrb[0].mxu0
        %1162 = vmatprep.mubr.bf16.mxu0 0
        %1163 = vmatmul.mubr.bf16.gmra.mrb[0].mxu0 %v985
        %v1164 = vpop.f32.mrb[0].mxu0
        %v1165 = vadd.f32 %v570, %v1164
        %v1166 = vpop.f32.mrb[0].mxu0
        %v1167 = vpop.f32.mrb[0].mxu0
        %v1168 = vadd.f32 %v575, %v1167
        %v1169 = vpop.f32.mrb[0].mxu0
        %1170 = vmatprep.mubr.bf16.mxu0 0
        %1171 = vmatmul.mubr.bf16.gmra.mrb[0].mxu0 %v988
        %v1172 = vpop.f32.mrb[0].mxu0
        %v1173 = vadd.f32 %v580, %v1172
        %v1174 = vpop.f32.mrb[0].mxu0
        %v1175 = vpop.f32.mrb[0].mxu0
        %v1176 = vadd.f32 %v585, %v1175
        %v1177 = vpop.f32.mrb[0].mxu0
        %1178 = vmatprep.mubr.bf16.mxu0 0
        %1179 = vmatmul.mubr.bf16.gmra.mrb[0].mxu0 %v991
        %v1180 = vpop.f32.mrb[0].mxu0
        %v1181 = vadd.f32 %v590, %v1180
        %v1182 = vpop.f32.mrb[0].mxu0
        %v1183 = vpop.f32.mrb[0].mxu0
        %v1184 = vadd.f32 %v595, %v1183
        %v1185 = vpop.f32.mrb[0].mxu0
        %1186 = vmatprep.mubr.bf16.mxu0 0
        %1187 = vmatmul.mubr.bf16.gmra.mrb[0].mxu0 %v994
        %v1188 = vpop.f32.mrb[0].mxu0
        %v1189 = vadd.f32 %v600, %v1188
        %v1190 = vpop.f32.mrb[0].mxu0
        %v1191 = vpop.f32.mrb[0].mxu0
        %v1192 = vadd.f32 %v605, %v1191
        %v1193 = vpop.f32.mrb[0].mxu0
        %1194 = vmatprep.mubr.bf16.mxu0 0
        %1195 = vmatmul.mubr.bf16.gmra.mrb[0].mxu0 %v997
        %v1196 = vpop.f32.mrb[0].mxu0
        %v1197 = vadd.f32 %v610, %v1196
        %v1198 = vpop.f32.mrb[0].mxu0
        %v1199 = vpop.f32.mrb[0].mxu0
        %v1200 = vadd.f32 %v615, %v1199
        %v1201 = vpop.f32.mrb[0].mxu0
        %1202 = vmatprep.mubr.bf16.mxu0 0
        %1203 = vmatmul.mubr.bf16.gmra.mrb[0].mxu0 %v1000
        %v1204 = vpop.f32.mrb[0].mxu0
        %v1205 = vadd.f32 %v620, %v1204
        %v1206 = vpop.f32.mrb[0].mxu0
        %v1207 = vpop.f32.mrb[0].mxu0
        %v1208 = vadd.f32 %v625, %v1207
        %v1209 = vpop.f32.mrb[0].mxu0
        %1210 = vmatprep.mubr.bf16.mxu0 0
        %1211 = vmatmul.mubr.bf16.gmra.mrb[0].mxu0 %v1003
        %v1212 = vpop.f32.mrb[0].mxu0
        %v1213 = vadd.f32 %v630, %v1212
        %v1214 = vpop.f32.mrb[0].mxu0
        %v1215 = vpop.f32.mrb[0].mxu0
        %v1216 = vadd.f32 %v635, %v1215
        %v1217 = vpop.f32.mrb[0].mxu0
        %1218 = vmatprep.mubr.bf16.mxu0 0
        %1219 = vmatmul.mubr.bf16.gmra.mrb[0].mxu0 %v1006
        %v1220 = vpop.f32.mrb[0].mxu0
        %v1221 = vadd.f32 %v640, %v1220
        %v1222 = vpop.f32.mrb[0].mxu0
        %v1223 = vpop.f32.mrb[0].mxu0
        %v1224 = vadd.f32 %v645, %v1223
        %v1225 = vpop.f32.mrb[0].mxu0
        %1226 = vmatprep.mubr.bf16.mxu0 0
        %1227 = vmatmul.mubr.bf16.gmra.mrb[0].mxu0 %v1009
        %v1228 = vpop.f32.mrb[0].mxu0
        %v1229 = vadd.f32 %v650, %v1228
        %v1230 = vpop.f32.mrb[0].mxu0
        %v1231 = vpop.f32.mrb[0].mxu0
        %v1232 = vadd.f32 %v655, %v1231
        %v1233 = vpop.f32.mrb[0].mxu0
        %1234 = vmatprep.mubr.bf16.mxu0 0
        %1235 = vmatmul.mubr.bf16.gmra.mrb[0].mxu0 %v1012
        %v1236 = vpop.f32.mrb[0].mxu0
        %v1237 = vadd.f32 %v660, %v1236
        %v1238 = vpop.f32.mrb[0].mxu0
        %v1239 = vpop.f32.mrb[0].mxu0
        %v1240 = vadd.f32 %v665, %v1239
        %v1241 = vpop.f32.mrb[0].mxu0
        %1242 = vmatprep.mubr.bf16.mxu0 0
        %1243 = vmatmul.mubr.bf16.gmra.mrb[0].mxu0 %v1015
        %v1244 = vpop.f32.mrb[0].mxu0
        %v1245 = vadd.f32 %v670, %v1244
        %v1246 = vpop.f32.mrb[0].mxu0
        %v1247 = vpop.f32.mrb[0].mxu0
        %v1248 = vadd.f32 %v675, %v1247
        %v1249 = vpop.f32.mrb[0].mxu0
        %1250 = vmatprep.mubr.bf16.mxu0 0
        %1251 = vmatmul.mubr.bf16.gmra.mrb[0].mxu0 %v1018
        %v1252 = vpop.f32.mrb[0].mxu0
        %v1253 = vadd.f32 %v680, %v1252
        %v1254 = vpop.f32.mrb[0].mxu0
        %v1255 = vpop.f32.mrb[0].mxu0
        %v1256 = vadd.f32 %v685, %v1255
        %v1257 = vpop.f32.mrb[0].mxu0
        %1258 = vmatprep.mubr.bf16.mxu0 0
        %1259 = vmatmul.mubr.bf16.gmra.mrb[0].mxu0 %v1021
        %v1260 = vpop.f32.mrb[0].mxu0
        %v1261 = vadd.f32 %v690, %v1260
        %v1262 = vpop.f32.mrb[0].mxu0
        %v1263 = vpop.f32.mrb[0].mxu0
        %v1264 = vadd.f32 %v695, %v1263
        %v1265 = vpop.f32.mrb[0].mxu0
        %1266 = vmatprep.mubr.bf16.mxu0 0
        %1267 = vmatmul.mubr.bf16.gmra.mrb[0].mxu0 %v1024
        %v1268 = vpop.f32.mrb[0].mxu0
        %v1269 = vadd.f32 %v700, %v1268
        %v1270 = vpop.f32.mrb[0].mxu0
        %v1271 = vpop.f32.mrb[0].mxu0
        %v1272 = vadd.f32 %v705, %v1271
        %v1273 = vpop.f32.mrb[0].mxu0
        %1274 = vmatprep.mubr.bf16.mxu0 0
        %1275 = vmatmul.mubr.bf16.gmra.mrb[0].mxu0 %v1027
        %v1276 = vpop.f32.mrb[0].mxu0
        %v1277 = vadd.f32 %v710, %v1276
        %v1278 = vpop.f32.mrb[0].mxu0
        %v1279 = vpop.f32.mrb[0].mxu0
        %v1280 = vadd.f32 %v715, %v1279
        %v1281 = vpop.f32.mrb[0].mxu0
        %1282 = vmatprep.mubr.bf16.mxu0 0
        %1283 = vmatmul.mubr.bf16.gmra.mrb[0].mxu0 %v1030
        %v1284 = vpop.f32.mrb[0].mxu0
        %v1285 = vadd.f32 %v720, %v1284
        %v1286 = vpop.f32.mrb[0].mxu0
        %v1287 = vpop.f32.mrb[0].mxu0
        %v1288 = vadd.f32 %v725, %v1287
        %v1289 = vpop.f32.mrb[0].mxu0
        %1290 = vmatprep.mubr.bf16.mxu0 0
        %1291 = vmatmul.mubr.bf16.gmra.mrb[0].mxu0 %v1033
        %v1292 = vpop.f32.mrb[0].mxu0
        %v1293 = vadd.f32 %v730, %v1292
        %v1294 = vpop.f32.mrb[0].mxu0
        %v1295 = vpop.f32.mrb[0].mxu0
        %v1296 = vadd.f32 %v735, %v1295
        %v1297 = vpop.f32.mrb[0].mxu0
        %1298 = vmatprep.mubr.bf16.mxu0 0
        %1299 = vmatmul.mubr.bf16.gmra.mrb[0].mxu0 %v1036
        %v1300 = vpop.f32.mrb[0].mxu0
        %v1301 = vadd.f32 %v740, %v1300
        %v1302 = vpop.f32.mrb[0].mxu0
        %v1303 = vpop.f32.mrb[0].mxu0
        %v1304 = vadd.f32 %v745, %v1303
        %v1305 = vpop.f32.mrb[0].mxu0
        %1306 = vmatprep.mubr.bf16.mxu0 0
        %1307 = vmatmul.mubr.bf16.gmra.mrb[0].mxu0 %v1039
        %v1308 = vpop.f32.mrb[0].mxu0
        %v1309 = vadd.f32 %v750, %v1308
        %v1310 = vpop.f32.mrb[0].mxu0
        %v1311 = vpop.f32.mrb[0].mxu0
        %v1312 = vadd.f32 %v755, %v1311
        %v1313 = vpop.f32.mrb[0].mxu0
        %1314 = vmatprep.mubr.bf16.mxu0 0
        %1315 = vmatmul.mubr.bf16.gmra.mrb[0].mxu0 %v1042
        %v1316 = vpop.f32.mrb[0].mxu0
        %v1317 = vadd.f32 %v760, %v1316
        %v1318 = vpop.f32.mrb[0].mxu0
        %v1319 = vpop.f32.mrb[0].mxu0
        %v1320 = vadd.f32 %v765, %v1319
        %v1321 = vpop.f32.mrb[0].mxu0
        %1322 = vmatprep.mubr.bf16.mxu0 0
        %1323 = vmatmul.mubr.bf16.gmra.mrb[0].mxu0 %v1045
        %v1324 = vpop.f32.mrb[0].mxu0
        %v1325 = vadd.f32 %v770, %v1324
        %v1326 = vpop.f32.mrb[0].mxu0
        %v1327 = vpop.f32.mrb[0].mxu0
        %v1328 = vadd.f32 %v775, %v1327
        %v1329 = vpop.f32.mrb[0].mxu0
        %1330 = vmatprep.mubr.bf16.mxu0 0
        %1331 = vmatmul.mubr.bf16.gmra.mrb[0].mxu0 %v1048
        %v1332 = vpop.f32.mrb[0].mxu0
        %v1333 = vadd.f32 %v780, %v1332
        %v1334 = vpop.f32.mrb[0].mxu0
        %v1335 = vpop.f32.mrb[0].mxu0
        %v1336 = vadd.f32 %v785, %v1335
        %v1337 = vpop.f32.mrb[0].mxu0
        %1338 = vdwg.mxu0
        %v1339 = vmax.f32 %v1085, 0.0
        %v1340 = vmax.f32 %v1088, 0.0
        %v1341 = vmax.f32 %v1093, 0.0
        %v1342 = vmax.f32 %v1096, 0.0
        %v1343 = vmax.f32 %v1101, 0.0
        %v1344 = vmax.f32 %v1104, 0.0
        %v1345 = vmax.f32 %v1109, 0.0
        %v1346 = vmax.f32 %v1112, 0.0
        %v1347 = vmax.f32 %v1117, 0.0
        %v1348 = vmax.f32 %v1120, 0.0
        %v1349 = vmax.f32 %v1125, 0.0
        %v1350 = vmax.f32 %v1128, 0.0
        %v1351 = vmax.f32 %v1133, 0.0
        %v1352 = vmax.f32 %v1136, 0.0
        %v1353 = vmax.f32 %v1141, 0.0
        %v1354 = vmax.f32 %v1144, 0.0
        %v1355 = vmax.f32 %v1149, 0.0
        %v1356 = vmax.f32 %v1152, 0.0
        %v1357 = vmax.f32 %v1157, 0.0
        %v1358 = vmax.f32 %v1160, 0.0
        %v1359 = vmax.f32 %v1165, 0.0
        %v1360 = vmax.f32 %v1168, 0.0
        %v1361 = vmax.f32 %v1173, 0.0
        %v1362 = vmax.f32 %v1176, 0.0
        %v1363 = vmax.f32 %v1181, 0.0
        %v1364 = vmax.f32 %v1184, 0.0
        %v1365 = vmax.f32 %v1189, 0.0
        %v1366 = vmax.f32 %v1192, 0.0
        %v1367 = vmax.f32 %v1197, 0.0
        %v1368 = vmax.f32 %v1200, 0.0
        %v1369 = vmax.f32 %v1205, 0.0
        %v1370 = vmax.f32 %v1208, 0.0
        %v1371 = vmax.f32 %v1213, 0.0
        %v1372 = vmax.f32 %v1216, 0.0
        %v1373 = vmax.f32 %v1221, 0.0
        %v1374 = vmax.f32 %v1224, 0.0
        %v1375 = vmax.f32 %v1229, 0.0
        %v1376 = vmax.f32 %v1232, 0.0
        %v1377 = vmax.f32 %v1237, 0.0
        %v1378 = vmax.f32 %v1240, 0.0
        %v1379 = vmax.f32 %v1245, 0.0
        %v1380 = vmax.f32 %v1248, 0.0
        %v1381 = vmax.f32 %v1253, 0.0
        %v1382 = vmax.f32 %v1256, 0.0
        %v1383 = vmax.f32 %v1261, 0.0
        %v1384 = vmax.f32 %v1264, 0.0
        %v1385 = vmax.f32 %v1269, 0.0
        %v1386 = vmax.f32 %v1272, 0.0
        %v1387 = vmax.f32 %v1277, 0.0
        %v1388 = vmax.f32 %v1280, 0.0
        %v1389 = vmax.f32 %v1285, 0.0
        %v1390 = vmax.f32 %v1288, 0.0
        %v1391 = vmax.f32 %v1293, 0.0
        %v1392 = vmax.f32 %v1296, 0.0
        %v1393 = vmax.f32 %v1301, 0.0
        %v1394 = vmax.f32 %v1304, 0.0
        %v1395 = vmax.f32 %v1309, 0.0
        %v1396 = vmax.f32 %v1312, 0.0
        %v1397 = vmax.f32 %v1317, 0.0
        %v1398 = vmax.f32 %v1320, 0.0
        %v1399 = vmax.f32 %v1325, 0.0
        %v1400 = vmax.f32 %v1328, 0.0
        %v1401 = vmax.f32 %v1333, 0.0
        %v1402 = vmax.f32 %v1336, 0.0
        %v1403 = vld [vmem:[%s3] sm:$0xff]
        %v1404 = vld [vmem:[%s3 + $0x8] sm:$0xff]
        %v1405 = vld [vmem:[%s3 + $0x10] sm:$0xff]
        %v1406 = vld [vmem:[%s3 + $0x18] sm:$0xff]
        %v1407 = vld [vmem:[%s3 + $0x20] sm:$0xff]
        %v1408 = vld [vmem:[%s3 + $0x28] sm:$0xff]
        %v1409 = vld [vmem:[%s3 + $0x30] sm:$0xff]
        %v1410 = vld [vmem:[%s3 + $0x38] sm:$0xff]
        %v1411 = vld [vmem:[%s3 + $0x40] sm:$0xff]
        %v1412 = vld [vmem:[%s3 + $0x48] sm:$0xff]
        %v1413 = vld [vmem:[%s3 + $0x50] sm:$0xff]
        %v1414 = vld [vmem:[%s3 + $0x58] sm:$0xff]
        %v1415 = vld [vmem:[%s3 + $0x60] sm:$0xff]
        %v1416 = vld [vmem:[%s3 + $0x68] sm:$0xff]
        %v1417 = vld [vmem:[%s3 + $0x70] sm:$0xff]
        %v1418 = vld [vmem:[%s3 + $0x78] sm:$0xff]
        %v1419 = vld [vmem:[%s3 + $0x80] sm:$0xff]
        %v1420 = vld [vmem:[%s3 + $0x88] sm:$0xff]
        %v1421 = vld [vmem:[%s3 + $0x90] sm:$0xff]
        %v1422 = vld [vmem:[%s3 + $0x98] sm:$0xff]
        %v1423 = vld [vmem:[%s3 + $0xa0] sm:$0xff]
        %v1424 = vld [vmem:[%s3 + $0xa8] sm:$0xff]
        %v1425 = vld [vmem:[%s3 + $0xb0] sm:$0xff]
        %v1426 = vld [vmem:[%s3 + $0xb8] sm:$0xff]
        %v1427 = vld [vmem:[%s3 + $0xc0] sm:$0xff]
        %v1428 = vld [vmem:[%s3 + $0xc8] sm:$0xff]
        %v1429 = vld [vmem:[%s3 + $0xd0] sm:$0xff]
        %v1430 = vld [vmem:[%s3 + $0xd8] sm:$0xff]
        %v1431 = vld [vmem:[%s3 + $0xe0] sm:$0xff]
        %v1432 = vld [vmem:[%s3 + $0xe8] sm:$0xff]
        %v1433 = vld [vmem:[%s3 + $0xf0] sm:$0xff]
        %v1434 = vld [vmem:[%s3 + $0xf8] sm:$0xff]
        %v1435 = vld [vmem:[%s3 + $0x100] sm:$0xff]
        %v1436 = vld [vmem:[%s3 + $0x108] sm:$0xff]
        %v1437 = vld [vmem:[%s3 + $0x110] sm:$0xff]
        %v1438 = vld [vmem:[%s3 + $0x118] sm:$0xff]
        %v1439 = vld [vmem:[%s3 + $0x120] sm:$0xff]
        %v1440 = vld [vmem:[%s3 + $0x128] sm:$0xff]
        %v1441 = vld [vmem:[%s3 + $0x130] sm:$0xff]
        %v1442 = vld [vmem:[%s3 + $0x138] sm:$0xff]
        %v1443 = vld [vmem:[%s3 + $0x140] sm:$0xff]
        %v1444 = vld [vmem:[%s3 + $0x148] sm:$0xff]
        %v1445 = vld [vmem:[%s3 + $0x150] sm:$0xff]
        %v1446 = vld [vmem:[%s3 + $0x158] sm:$0xff]
        %v1447 = vld [vmem:[%s3 + $0x160] sm:$0xff]
        %v1448 = vld [vmem:[%s3 + $0x168] sm:$0xff]
        %v1449 = vld [vmem:[%s3 + $0x170] sm:$0xff]
        %v1450 = vld [vmem:[%s3 + $0x178] sm:$0xff]
        %v1451 = vld [vmem:[%s3 + $0x180] sm:$0xff]
        %v1452 = vld [vmem:[%s3 + $0x188] sm:$0xff]
        %v1453 = vld [vmem:[%s3 + $0x190] sm:$0xff]
        %v1454 = vld [vmem:[%s3 + $0x198] sm:$0xff]
        %v1455 = vld [vmem:[%s3 + $0x1a0] sm:$0xff]
        %v1456 = vld [vmem:[%s3 + $0x1a8] sm:$0xff]
        %v1457 = vld [vmem:[%s3 + $0x1b0] sm:$0xff]
        %v1458 = vld [vmem:[%s3 + $0x1b8] sm:$0xff]
        %v1459 = vld [vmem:[%s3 + $0x1c0] sm:$0xff]
        %v1460 = vld [vmem:[%s3 + $0x1c8] sm:$0xff]
        %v1461 = vld [vmem:[%s3 + $0x1d0] sm:$0xff]
        %v1462 = vld [vmem:[%s3 + $0x1d8] sm:$0xff]
        %v1463 = vld [vmem:[%s3 + $0x1e0] sm:$0xff]
        %v1464 = vld [vmem:[%s3 + $0x1e8] sm:$0xff]
        %v1465 = vld [vmem:[%s3 + $0x1f0] sm:$0xff]
        %v1466 = vld [vmem:[%s3 + $0x1f8] sm:$0xff]
        %v1467 = vld [vmem:[%s3 + $0x200] sm:$0xff]
        %v1468 = vld [vmem:[%s3 + $0x208] sm:$0xff]
        %v1469 = vld [vmem:[%s3 + $0x210] sm:$0xff]
        %v1470 = vld [vmem:[%s3 + $0x218] sm:$0xff]
        %v1471 = vld [vmem:[%s3 + $0x220] sm:$0xff]
        %v1472 = vld [vmem:[%s3 + $0x228] sm:$0xff]
        %v1473 = vld [vmem:[%s3 + $0x230] sm:$0xff]
        %v1474 = vld [vmem:[%s3 + $0x238] sm:$0xff]
        %v1475 = vld [vmem:[%s3 + $0x240] sm:$0xff]
        %v1476 = vld [vmem:[%s3 + $0x248] sm:$0xff]
        %v1477 = vld [vmem:[%s3 + $0x250] sm:$0xff]
        %v1478 = vld [vmem:[%s3 + $0x258] sm:$0xff]
        %v1479 = vld [vmem:[%s3 + $0x260] sm:$0xff]
        %v1480 = vld [vmem:[%s3 + $0x268] sm:$0xff]
        %v1481 = vld [vmem:[%s3 + $0x270] sm:$0xff]
        %v1482 = vld [vmem:[%s3 + $0x278] sm:$0xff]
        %v1483 = vld [vmem:[%s3 + $0x280] sm:$0xff]
        %v1484 = vld [vmem:[%s3 + $0x288] sm:$0xff]
        %v1485 = vld [vmem:[%s3 + $0x290] sm:$0xff]
        %v1486 = vld [vmem:[%s3 + $0x298] sm:$0xff]
        %v1487 = vld [vmem:[%s3 + $0x2a0] sm:$0xff]
        %v1488 = vld [vmem:[%s3 + $0x2a8] sm:$0xff]
        %v1489 = vld [vmem:[%s3 + $0x2b0] sm:$0xff]
        %v1490 = vld [vmem:[%s3 + $0x2b8] sm:$0xff]
        %v1491 = vld [vmem:[%s3 + $0x2c0] sm:$0xff]
        %v1492 = vld [vmem:[%s3 + $0x2c8] sm:$0xff]
        %v1493 = vld [vmem:[%s3 + $0x2d0] sm:$0xff]
        %v1494 = vld [vmem:[%s3 + $0x2d8] sm:$0xff]
        %v1495 = vld [vmem:[%s3 + $0x2e0] sm:$0xff]
        %v1496 = vld [vmem:[%s3 + $0x2e8] sm:$0xff]
        %v1497 = vld [vmem:[%s3 + $0x2f0] sm:$0xff]
        %v1498 = vld [vmem:[%s3 + $0x2f8] sm:$0xff]
        %v1499 = vld [vmem:[%s3 + $0x300] sm:$0xff]
        %v1500 = vld [vmem:[%s3 + $0x308] sm:$0xff]
        %v1501 = vld [vmem:[%s3 + $0x310] sm:$0xff]
        %v1502 = vld [vmem:[%s3 + $0x318] sm:$0xff]
        %v1503 = vld [vmem:[%s3 + $0x320] sm:$0xff]
        %v1504 = vld [vmem:[%s3 + $0x328] sm:$0xff]
        %v1505 = vld [vmem:[%s3 + $0x330] sm:$0xff]
        %v1506 = vld [vmem:[%s3 + $0x338] sm:$0xff]
        %v1507 = vld [vmem:[%s3 + $0x340] sm:$0xff]
        %v1508 = vld [vmem:[%s3 + $0x348] sm:$0xff]
        %v1509 = vld [vmem:[%s3 + $0x350] sm:$0xff]
        %v1510 = vld [vmem:[%s3 + $0x358] sm:$0xff]
        %v1511 = vld [vmem:[%s3 + $0x360] sm:$0xff]
        %v1512 = vld [vmem:[%s3 + $0x368] sm:$0xff]
        %v1513 = vld [vmem:[%s3 + $0x370] sm:$0xff]
        %v1514 = vld [vmem:[%s3 + $0x378] sm:$0xff]
        %v1515 = vld [vmem:[%s3 + $0x380] sm:$0xff]
        %v1516 = vld [vmem:[%s3 + $0x388] sm:$0xff]
        %v1517 = vld [vmem:[%s3 + $0x390] sm:$0xff]
        %v1518 = vld [vmem:[%s3 + $0x398] sm:$0xff]
        %v1519 = vld [vmem:[%s3 + $0x3a0] sm:$0xff]
        %v1520 = vld [vmem:[%s3 + $0x3a8] sm:$0xff]
        %v1521 = vld [vmem:[%s3 + $0x3b0] sm:$0xff]
        %v1522 = vld [vmem:[%s3 + $0x3b8] sm:$0xff]
        %v1523 = vld [vmem:[%s3 + $0x3c0] sm:$0xff]
        %v1524 = vld [vmem:[%s3 + $0x3c8] sm:$0xff]
        %v1525 = vld [vmem:[%s3 + $0x3d0] sm:$0xff]
        %v1526 = vld [vmem:[%s3 + $0x3d8] sm:$0xff]
        %v1527 = vld [vmem:[%s3 + $0x3e0] sm:$0xff]
        %v1528 = vld [vmem:[%s3 + $0x3e8] sm:$0xff]
        %v1529 = vld [vmem:[%s3 + $0x3f0] sm:$0xff]
        %v1530 = vld [vmem:[%s3 + $0x3f8] sm:$0xff]
        %v1531 = vpack.c.bf16 %v1340, %v1339
        %v1532 = vpack.c.bf16 %v1342, %v1341
        %v1533 = vpack.c.bf16 %v1344, %v1343
        %v1534 = vpack.c.bf16 %v1346, %v1345
        %v1535 = vpack.c.bf16 %v1348, %v1347
        %v1536 = vpack.c.bf16 %v1350, %v1349
        %v1537 = vpack.c.bf16 %v1352, %v1351
        %v1538 = vpack.c.bf16 %v1354, %v1353
        %v1539 = vpack.c.bf16 %v1356, %v1355
        %v1540 = vpack.c.bf16 %v1358, %v1357
        %v1541 = vpack.c.bf16 %v1360, %v1359
        %v1542 = vpack.c.bf16 %v1362, %v1361
        %v1543 = vpack.c.bf16 %v1364, %v1363
        %v1544 = vpack.c.bf16 %v1366, %v1365
        %v1545 = vpack.c.bf16 %v1368, %v1367
        %v1546 = vpack.c.bf16 %v1370, %v1369
        %v1547 = vpack.c.bf16 %v1372, %v1371
        %v1548 = vpack.c.bf16 %v1374, %v1373
        %v1549 = vpack.c.bf16 %v1376, %v1375
        %v1550 = vpack.c.bf16 %v1378, %v1377
        %v1551 = vpack.c.bf16 %v1380, %v1379
        %v1552 = vpack.c.bf16 %v1382, %v1381
        %v1553 = vpack.c.bf16 %v1384, %v1383
        %v1554 = vpack.c.bf16 %v1386, %v1385
        %v1555 = vpack.c.bf16 %v1388, %v1387
        %v1556 = vpack.c.bf16 %v1390, %v1389
        %v1557 = vpack.c.bf16 %v1392, %v1391
        %v1558 = vpack.c.bf16 %v1394, %v1393
        %v1559 = vpack.c.bf16 %v1396, %v1395
        %v1560 = vpack.c.bf16 %v1398, %v1397
        %v1561 = vpack.c.bf16 %v1400, %v1399
        %v1562 = vpack.c.bf16 %v1402, %v1401
        %v1563 = vld [vmem:[%s4] sm:$0xff]
        %v1564 = vld [vmem:[%s4 + $0x8] sm:$0xff]
        %v1565 = vld [vmem:[%s4 + $0x10] sm:$0xff]
        %v1566 = vld [vmem:[%s4 + $0x18] sm:$0xff]
        %v1567 = vld [vmem:[%s4 + $0x20] sm:$0xff]
        %v1568 = vld [vmem:[%s4 + $0x28] sm:$0xff]
        %v1569 = vld [vmem:[%s4 + $0x30] sm:$0xff]
        %v1570 = vld [vmem:[%s4 + $0x38] sm:$0xff]
        %v1571 = vld [vmem:[%s4 + $0x40] sm:$0xff]
        %v1572 = vld [vmem:[%s4 + $0x48] sm:$0xff]
        %v1573 = vld [vmem:[%s4 + $0x50] sm:$0xff]
        %v1574 = vld [vmem:[%s4 + $0x58] sm:$0xff]
        %v1575 = vld [vmem:[%s4 + $0x60] sm:$0xff]
        %v1576 = vld [vmem:[%s4 + $0x68] sm:$0xff]
        %v1577 = vld [vmem:[%s4 + $0x70] sm:$0xff]
        %v1578 = vld [vmem:[%s4 + $0x78] sm:$0xff]
        %v1579 = vld [vmem:[%s4 + $0x80] sm:$0xff]
        %v1580 = vld [vmem:[%s4 + $0x88] sm:$0xff]
        %v1581 = vld [vmem:[%s4 + $0x90] sm:$0xff]
        %v1582 = vld [vmem:[%s4 + $0x98] sm:$0xff]
        %v1583 = vld [vmem:[%s4 + $0xa0] sm:$0xff]
        %v1584 = vld [vmem:[%s4 + $0xa8] sm:$0xff]
        %v1585 = vld [vmem:[%s4 + $0xb0] sm:$0xff]
        %v1586 = vld [vmem:[%s4 + $0xb8] sm:$0xff]
        %v1587 = vld [vmem:[%s4 + $0xc0] sm:$0xff]
        %v1588 = vld [vmem:[%s4 + $0xc8] sm:$0xff]
        %v1589 = vld [vmem:[%s4 + $0xd0] sm:$0xff]
        %v1590 = vld [vmem:[%s4 + $0xd8] sm:$0xff]
        %v1591 = vld [vmem:[%s4 + $0xe0] sm:$0xff]
        %v1592 = vld [vmem:[%s4 + $0xe8] sm:$0xff]
        %v1593 = vld [vmem:[%s4 + $0xf0] sm:$0xff]
        %v1594 = vld [vmem:[%s4 + $0xf8] sm:$0xff]
        %v1595 = vld [vmem:[%s4 + $0x100] sm:$0xff]
        %v1596 = vld [vmem:[%s4 + $0x108] sm:$0xff]
        %v1597 = vld [vmem:[%s4 + $0x110] sm:$0xff]
        %v1598 = vld [vmem:[%s4 + $0x118] sm:$0xff]
        %v1599 = vld [vmem:[%s4 + $0x120] sm:$0xff]
        %v1600 = vld [vmem:[%s4 + $0x128] sm:$0xff]
        %v1601 = vld [vmem:[%s4 + $0x130] sm:$0xff]
        %v1602 = vld [vmem:[%s4 + $0x138] sm:$0xff]
        %v1603 = vld [vmem:[%s4 + $0x140] sm:$0xff]
        %v1604 = vld [vmem:[%s4 + $0x148] sm:$0xff]
        %v1605 = vld [vmem:[%s4 + $0x150] sm:$0xff]
        %v1606 = vld [vmem:[%s4 + $0x158] sm:$0xff]
        %v1607 = vld [vmem:[%s4 + $0x160] sm:$0xff]
        %v1608 = vld [vmem:[%s4 + $0x168] sm:$0xff]
        %v1609 = vld [vmem:[%s4 + $0x170] sm:$0xff]
        %v1610 = vld [vmem:[%s4 + $0x178] sm:$0xff]
        %v1611 = vld [vmem:[%s4 + $0x180] sm:$0xff]
        %v1612 = vld [vmem:[%s4 + $0x188] sm:$0xff]
        %v1613 = vld [vmem:[%s4 + $0x190] sm:$0xff]
        %v1614 = vld [vmem:[%s4 + $0x198] sm:$0xff]
        %v1615 = vld [vmem:[%s4 + $0x1a0] sm:$0xff]
        %v1616 = vld [vmem:[%s4 + $0x1a8] sm:$0xff]
        %v1617 = vld [vmem:[%s4 + $0x1b0] sm:$0xff]
        %v1618 = vld [vmem:[%s4 + $0x1b8] sm:$0xff]
        %v1619 = vld [vmem:[%s4 + $0x1c0] sm:$0xff]
        %v1620 = vld [vmem:[%s4 + $0x1c8] sm:$0xff]
        %v1621 = vld [vmem:[%s4 + $0x1d0] sm:$0xff]
        %v1622 = vld [vmem:[%s4 + $0x1d8] sm:$0xff]
        %v1623 = vld [vmem:[%s4 + $0x1e0] sm:$0xff]
        %v1624 = vld [vmem:[%s4 + $0x1e8] sm:$0xff]
        %v1625 = vld [vmem:[%s4 + $0x1f0] sm:$0xff]
        %v1626 = vld [vmem:[%s4 + $0x1f8] sm:$0xff]
        %1628 = vset.pattern.permute.xlu0 0
        %1629 = vperm.xlu0 %1628, %v1563
        %v1630 = vpop.permute.xlu0 %1629
        %1633 = vset.pattern.permute.xlu0 0
        %1634 = vperm.xlu0 %1633, %v1564
        %v1635 = vpop.permute.xlu0 %1634
        %1638 = vset.pattern.permute.xlu0 0
        %1639 = vperm.xlu0 %1638, %v1565
        %v1640 = vpop.permute.xlu0 %1639
        %1643 = vset.pattern.permute.xlu0 0
        %1644 = vperm.xlu0 %1643, %v1566
        %v1645 = vpop.permute.xlu0 %1644
        %1648 = vset.pattern.permute.xlu0 0
        %1649 = vperm.xlu0 %1648, %v1567
        %v1650 = vpop.permute.xlu0 %1649
        %1653 = vset.pattern.permute.xlu0 0
        %1654 = vperm.xlu0 %1653, %v1568
        %v1655 = vpop.permute.xlu0 %1654
        %1658 = vset.pattern.permute.xlu0 0
        %1659 = vperm.xlu0 %1658, %v1569
        %v1660 = vpop.permute.xlu0 %1659
        %1663 = vset.pattern.permute.xlu0 0
        %1664 = vperm.xlu0 %1663, %v1570
        %v1665 = vpop.permute.xlu0 %1664
        %1668 = vset.pattern.permute.xlu0 0
        %1669 = vperm.xlu0 %1668, %v1571
        %v1670 = vpop.permute.xlu0 %1669
        %1673 = vset.pattern.permute.xlu0 0
        %1674 = vperm.xlu0 %1673, %v1572
        %v1675 = vpop.permute.xlu0 %1674
        %1678 = vset.pattern.permute.xlu0 0
        %1679 = vperm.xlu0 %1678, %v1573
        %v1680 = vpop.permute.xlu0 %1679
        %1683 = vset.pattern.permute.xlu0 0
        %1684 = vperm.xlu0 %1683, %v1574
        %v1685 = vpop.permute.xlu0 %1684
        %1688 = vset.pattern.permute.xlu0 0
        %1689 = vperm.xlu0 %1688, %v1575
        %v1690 = vpop.permute.xlu0 %1689
        %1693 = vset.pattern.permute.xlu0 0
        %1694 = vperm.xlu0 %1693, %v1576
        %v1695 = vpop.permute.xlu0 %1694
        %1698 = vset.pattern.permute.xlu0 0
        %1699 = vperm.xlu0 %1698, %v1577
        %v1700 = vpop.permute.xlu0 %1699
        %1703 = vset.pattern.permute.xlu0 0
        %1704 = vperm.xlu0 %1703, %v1578
        %v1705 = vpop.permute.xlu0 %1704
        %1708 = vset.pattern.permute.xlu0 0
        %1709 = vperm.xlu0 %1708, %v1579
        %v1710 = vpop.permute.xlu0 %1709
        %1713 = vset.pattern.permute.xlu0 0
        %1714 = vperm.xlu0 %1713, %v1580
        %v1715 = vpop.permute.xlu0 %1714
        %1718 = vset.pattern.permute.xlu0 0
        %1719 = vperm.xlu0 %1718, %v1581
        %v1720 = vpop.permute.xlu0 %1719
        %1723 = vset.pattern.permute.xlu0 0
        %1724 = vperm.xlu0 %1723, %v1582
        %v1725 = vpop.permute.xlu0 %1724
        %1728 = vset.pattern.permute.xlu0 0
        %1729 = vperm.xlu0 %1728, %v1583
        %v1730 = vpop.permute.xlu0 %1729
        %1733 = vset.pattern.permute.xlu0 0
        %1734 = vperm.xlu0 %1733, %v1584
        %v1735 = vpop.permute.xlu0 %1734
        %1738 = vset.pattern.permute.xlu0 0
        %1739 = vperm.xlu0 %1738, %v1585
        %v1740 = vpop.permute.xlu0 %1739
        %1743 = vset.pattern.permute.xlu0 0
        %1744 = vperm.xlu0 %1743, %v1586
        %v1745 = vpop.permute.xlu0 %1744
        %1748 = vset.pattern.permute.xlu0 0
        %1749 = vperm.xlu0 %1748, %v1587
        %v1750 = vpop.permute.xlu0 %1749
        %1753 = vset.pattern.permute.xlu0 0
        %1754 = vperm.xlu0 %1753, %v1588
        %v1755 = vpop.permute.xlu0 %1754
        %1758 = vset.pattern.permute.xlu0 0
        %1759 = vperm.xlu0 %1758, %v1589
        %v1760 = vpop.permute.xlu0 %1759
        %1763 = vset.pattern.permute.xlu0 0
        %1764 = vperm.xlu0 %1763, %v1590
        %v1765 = vpop.permute.xlu0 %1764
        %1768 = vset.pattern.permute.xlu0 0
        %1769 = vperm.xlu0 %1768, %v1591
        %v1770 = vpop.permute.xlu0 %1769
        %1773 = vset.pattern.permute.xlu0 0
        %1774 = vperm.xlu0 %1773, %v1592
        %v1775 = vpop.permute.xlu0 %1774
        %1778 = vset.pattern.permute.xlu0 0
        %1779 = vperm.xlu0 %1778, %v1593
        %v1780 = vpop.permute.xlu0 %1779
        %1783 = vset.pattern.permute.xlu0 0
        %1784 = vperm.xlu0 %1783, %v1594
        %v1785 = vpop.permute.xlu0 %1784
        %1788 = vset.pattern.permute.xlu0 0
        %1789 = vperm.xlu0 %1788, %v1595
        %v1790 = vpop.permute.xlu0 %1789
        %1793 = vset.pattern.permute.xlu0 0
        %1794 = vperm.xlu0 %1793, %v1596
        %v1795 = vpop.permute.xlu0 %1794
        %1798 = vset.pattern.permute.xlu0 0
        %1799 = vperm.xlu0 %1798, %v1597
        %v1800 = vpop.permute.xlu0 %1799
        %1803 = vset.pattern.permute.xlu0 0
        %1804 = vperm.xlu0 %1803, %v1598
        %v1805 = vpop.permute.xlu0 %1804
        %1808 = vset.pattern.permute.xlu0 0
        %1809 = vperm.xlu0 %1808, %v1599
        %v1810 = vpop.permute.xlu0 %1809
        %1813 = vset.pattern.permute.xlu0 0
        %1814 = vperm.xlu0 %1813, %v1600
        %v1815 = vpop.permute.xlu0 %1814
        %1818 = vset.pattern.permute.xlu0 0
        %1819 = vperm.xlu0 %1818, %v1601
        %v1820 = vpop.permute.xlu0 %1819
        %1823 = vset.pattern.permute.xlu0 0
        %1824 = vperm.xlu0 %1823, %v1602
        %v1825 = vpop.permute.xlu0 %1824
        %1828 = vset.pattern.permute.xlu0 0
        %1829 = vperm.xlu0 %1828, %v1603
        %v1830 = vpop.permute.xlu0 %1829
        %1833 = vset.pattern.permute.xlu0 0
        %1834 = vperm.xlu0 %1833, %v1604
        %v1835 = vpop.permute.xlu0 %1834
        %1838 = vset.pattern.permute.xlu0 0
        %1839 = vperm.xlu0 %1838, %v1605
        %v1840 = vpop.permute.xlu0 %1839
        %1843 = vset.pattern.permute.xlu0 0
        %1844 = vperm.xlu0 %1843, %v1606
        %v1845 = vpop.permute.xlu0 %1844
        %1848 = vset.pattern.permute.xlu0 0
        %1849 = vperm.xlu0 %1848, %v1607
        %v1850 = vpop.permute.xlu0 %1849
        %1853 = vset.pattern.permute.xlu0 0
        %1854 = vperm.xlu0 %1853, %v1608
        %v1855 = vpop.permute.xlu0 %1854
        %1858 = vset.pattern.permute.xlu0 0
        %1859 = vperm.xlu0 %1858, %v1609
        %v1860 = vpop.permute.xlu0 %1859
        %1863 = vset.pattern.permute.xlu0 0
        %1864 = vperm.xlu0 %1863, %v1610
        %v1865 = vpop.permute.xlu0 %1864
        %1868 = vset.pattern.permute.xlu0 0
        %1869 = vperm.xlu0 %1868, %v1611
        %v1870 = vpop.permute.xlu0 %1869
        %1873 = vset.pattern.permute.xlu0 0
        %1874 = vperm.xlu0 %1873, %v1612
        %v1875 = vpop.permute.xlu0 %1874
        %1878 = vset.pattern.permute.xlu0 0
        %1879 = vperm.xlu0 %1878, %v1613
        %v1880 = vpop.permute.xlu0 %1879
        %1883 = vset.pattern.permute.xlu0 0
        %1884 = vperm.xlu0 %1883, %v1614
        %v1885 = vpop.permute.xlu0 %1884
        %1888 = vset.pattern.permute.xlu0 0
        %1889 = vperm.xlu0 %1888, %v1615
        %v1890 = vpop.permute.xlu0 %1889
        %1893 = vset.pattern.permute.xlu0 0
        %1894 = vperm.xlu0 %1893, %v1616
        %v1895 = vpop.permute.xlu0 %1894
        %1898 = vset.pattern.permute.xlu0 0
        %1899 = vperm.xlu0 %1898, %v1617
        %v1900 = vpop.permute.xlu0 %1899
        %1903 = vset.pattern.permute.xlu0 0
        %1904 = vperm.xlu0 %1903, %v1618
        %v1905 = vpop.permute.xlu0 %1904
        %1908 = vset.pattern.permute.xlu0 0
        %1909 = vperm.xlu0 %1908, %v1619
        %v1910 = vpop.permute.xlu0 %1909
        %1913 = vset.pattern.permute.xlu0 0
        %1914 = vperm.xlu0 %1913, %v1620
        %v1915 = vpop.permute.xlu0 %1914
        %1918 = vset.pattern.permute.xlu0 0
        %1919 = vperm.xlu0 %1918, %v1621
        %v1920 = vpop.permute.xlu0 %1919
        %1923 = vset.pattern.permute.xlu0 0
        %1924 = vperm.xlu0 %1923, %v1622
        %v1925 = vpop.permute.xlu0 %1924
        %1928 = vset.pattern.permute.xlu0 0
        %1929 = vperm.xlu0 %1928, %v1623
        %v1930 = vpop.permute.xlu0 %1929
        %1933 = vset.pattern.permute.xlu0 0
        %1934 = vperm.xlu0 %1933, %v1624
        %v1935 = vpop.permute.xlu0 %1934
        %1938 = vset.pattern.permute.xlu0 0
        %1939 = vperm.xlu0 %1938, %v1625
        %v1940 = vpop.permute.xlu0 %1939
        %1943 = vset.pattern.permute.xlu0 0
        %1944 = vperm.xlu0 %1943, %v1626
        %v1945 = vpop.permute.xlu0 %1944
        %v2075 = vunpack.c.l.b16 %v1403
        %v2076 = vunpack.c.h.b16 %v1403
        %v2077 = vunpack.c.l.b16 %v1404
        %v2078 = vunpack.c.h.b16 %v1404
        %v2079 = vunpack.c.l.b16 %v1405
        %v2080 = vunpack.c.h.b16 %v1405
        %v2081 = vunpack.c.l.b16 %v1406
        %v2082 = vunpack.c.h.b16 %v1406
        %v2083 = vunpack.c.l.b16 %v1407
        %v2084 = vunpack.c.h.b16 %v1407
        %v2085 = vunpack.c.l.b16 %v1408
        %v2086 = vunpack.c.h.b16 %v1408
        %v2087 = vunpack.c.l.b16 %v1409
        %v2088 = vunpack.c.h.b16 %v1409
        %v2089 = vunpack.c.l.b16 %v1410
        %v2090 = vunpack.c.h.b16 %v1410
        %v2091 = vunpack.c.l.b16 %v1411
        %v2092 = vunpack.c.h.b16 %v1411
        %v2093 = vunpack.c.l.b16 %v1412
        %v2094 = vunpack.c.h.b16 %v1412
        %v2095 = vunpack.c.l.b16 %v1413
        %v2096 = vunpack.c.h.b16 %v1413
        %v2097 = vunpack.c.l.b16 %v1414
        %v2098 = vunpack.c.h.b16 %v1414
        %v2099 = vunpack.c.l.b16 %v1415
        %v2100 = vunpack.c.h.b16 %v1415
        %v2101 = vunpack.c.l.b16 %v1416
        %v2102 = vunpack.c.h.b16 %v1416
        %v2103 = vunpack.c.l.b16 %v1417
        %v2104 = vunpack.c.h.b16 %v1417
        %v2105 = vunpack.c.l.b16 %v1418
        %v2106 = vunpack.c.h.b16 %v1418
        %v2107 = vunpack.c.l.b16 %v1419
        %v2108 = vunpack.c.h.b16 %v1419
        %v2109 = vunpack.c.l.b16 %v1420
        %v2110 = vunpack.c.h.b16 %v1420
        %v2111 = vunpack.c.l.b16 %v1421
        %v2112 = vunpack.c.h.b16 %v1421
        %v2113 = vunpack.c.l.b16 %v1422
        %v2114 = vunpack.c.h.b16 %v1422
        %v2115 = vunpack.c.l.b16 %v1423
        %v2116 = vunpack.c.h.b16 %v1423
        %v2117 = vunpack.c.l.b16 %v1424
        %v2118 = vunpack.c.h.b16 %v1424
        %v2119 = vunpack.c.l.b16 %v1425
        %v2120 = vunpack.c.h.b16 %v1425
        %v2121 = vunpack.c.l.b16 %v1426
        %v2122 = vunpack.c.h.b16 %v1426
        %v2123 = vunpack.c.l.b16 %v1427
        %v2124 = vunpack.c.h.b16 %v1427
        %v2125 = vunpack.c.l.b16 %v1428
        %v2126 = vunpack.c.h.b16 %v1428
        %v2127 = vunpack.c.l.b16 %v1429
        %v2128 = vunpack.c.h.b16 %v1429
        %v2129 = vunpack.c.l.b16 %v1430
        %v2130 = vunpack.c.h.b16 %v1430
        %v2131 = vunpack.c.l.b16 %v1431
        %v2132 = vunpack.c.h.b16 %v1431
        %v2133 = vunpack.c.l.b16 %v1432
        %v2134 = vunpack.c.h.b16 %v1432
        %v2135 = vunpack.c.l.b16 %v1433
        %v2136 = vunpack.c.h.b16 %v1433
        %v2137 = vunpack.c.l.b16 %v1434
        %v2138 = vunpack.c.h.b16 %v1434
        %v2139 = vunpack.c.l.b16 %v1435
        %v2140 = vunpack.c.h.b16 %v1435
        %v2141 = vunpack.c.l.b16 %v1436
        %v2142 = vunpack.c.h.b16 %v1436
        %v2143 = vunpack.c.l.b16 %v1437
        %v2144 = vunpack.c.h.b16 %v1437
        %v2145 = vunpack.c.l.b16 %v1438
        %v2146 = vunpack.c.h.b16 %v1438
        %v2147 = vunpack.c.l.b16 %v1439
        %v2148 = vunpack.c.h.b16 %v1439
        %v2149 = vunpack.c.l.b16 %v1440
        %v2150 = vunpack.c.h.b16 %v1440
        %v2151 = vunpack.c.l.b16 %v1441
        %v2152 = vunpack.c.h.b16 %v1441
        %v2153 = vunpack.c.l.b16 %v1442
        %v2154 = vunpack.c.h.b16 %v1442
        %v2155 = vunpack.c.l.b16 %v1443
        %v2156 = vunpack.c.h.b16 %v1443
        %v2157 = vunpack.c.l.b16 %v1444
        %v2158 = vunpack.c.h.b16 %v1444
        %v2159 = vunpack.c.l.b16 %v1445
        %v2160 = vunpack.c.h.b16 %v1445
        %v2161 = vunpack.c.l.b16 %v1446
        %v2162 = vunpack.c.h.b16 %v1446
        %v2163 = vunpack.c.l.b16 %v1447
        %v2164 = vunpack.c.h.b16 %v1447
        %v2165 = vunpack.c.l.b16 %v1448
        %v2166 = vunpack.c.h.b16 %v1448
        %v2167 = vunpack.c.l.b16 %v1449
        %v2168 = vunpack.c.h.b16 %v1449
        %v2169 = vunpack.c.l.b16 %v1450
        %v2170 = vunpack.c.h.b16 %v1450
        %v2171 = vunpack.c.l.b16 %v1451
        %v2172 = vunpack.c.h.b16 %v1451
        %v2173 = vunpack.c.l.b16 %v1452
        %v2174 = vunpack.c.h.b16 %v1452
        %v2175 = vunpack.c.l.b16 %v1453
        %v2176 = vunpack.c.h.b16 %v1453
        %v2177 = vunpack.c.l.b16 %v1454
        %v2178 = vunpack.c.h.b16 %v1454
        %v2179 = vunpack.c.l.b16 %v1455
        %v2180 = vunpack.c.h.b16 %v1455
        %v2181 = vunpack.c.l.b16 %v1456
        %v2182 = vunpack.c.h.b16 %v1456
        %v2183 = vunpack.c.l.b16 %v1457
        %v2184 = vunpack.c.h.b16 %v1457
        %v2185 = vunpack.c.l.b16 %v1458
        %v2186 = vunpack.c.h.b16 %v1458
        %v2187 = vunpack.c.l.b16 %v1459
        %v2188 = vunpack.c.h.b16 %v1459
        %v2189 = vunpack.c.l.b16 %v1460
        %v2190 = vunpack.c.h.b16 %v1460
        %v2191 = vunpack.c.l.b16 %v1461
        %v2192 = vunpack.c.h.b16 %v1461
        %v2193 = vunpack.c.l.b16 %v1462
        %v2194 = vunpack.c.h.b16 %v1462
        %v2195 = vunpack.c.l.b16 %v1463
        %v2196 = vunpack.c.h.b16 %v1463
        %v2197 = vunpack.c.l.b16 %v1464
        %v2198 = vunpack.c.h.b16 %v1464
        %v2199 = vunpack.c.l.b16 %v1465
        %v2200 = vunpack.c.h.b16 %v1465
        %v2201 = vunpack.c.l.b16 %v1466
        %v2202 = vunpack.c.h.b16 %v1466
        %v2203 = vunpack.c.l.b16 %v1467
        %v2204 = vunpack.c.h.b16 %v1467
        %v2205 = vunpack.c.l.b16 %v1468
        %v2206 = vunpack.c.h.b16 %v1468
        %v2207 = vunpack.c.l.b16 %v1469
        %v2208 = vunpack.c.h.b16 %v1469
        %v2209 = vunpack.c.l.b16 %v1470
        %v2210 = vunpack.c.h.b16 %v1470
        %v2211 = vunpack.c.l.b16 %v1471
        %v2212 = vunpack.c.h.b16 %v1471
        %v2213 = vunpack.c.l.b16 %v1472
        %v2214 = vunpack.c.h.b16 %v1472
        %v2215 = vunpack.c.l.b16 %v1473
        %v2216 = vunpack.c.h.b16 %v1473
        %v2217 = vunpack.c.l.b16 %v1474
        %v2218 = vunpack.c.h.b16 %v1474
        %v2219 = vunpack.c.l.b16 %v1475
        %v2220 = vunpack.c.h.b16 %v1475
        %v2221 = vunpack.c.l.b16 %v1476
        %v2222 = vunpack.c.h.b16 %v1476
        %v2223 = vunpack.c.l.b16 %v1477
        %v2224 = vunpack.c.h.b16 %v1477
        %v2225 = vunpack.c.l.b16 %v1478
        %v2226 = vunpack.c.h.b16 %v1478
        %v2227 = vunpack.c.l.b16 %v1479
        %v2228 = vunpack.c.h.b16 %v1479
        %v2229 = vunpack.c.l.b16 %v1480
        %v2230 = vunpack.c.h.b16 %v1480
        %v2231 = vunpack.c.l.b16 %v1481
        %v2232 = vunpack.c.h.b16 %v1481
        %v2233 = vunpack.c.l.b16 %v1482
        %v2234 = vunpack.c.h.b16 %v1482
        %v2235 = vunpack.c.l.b16 %v1483
        %v2236 = vunpack.c.h.b16 %v1483
        %v2237 = vunpack.c.l.b16 %v1484
        %v2238 = vunpack.c.h.b16 %v1484
        %v2239 = vunpack.c.l.b16 %v1485
        %v2240 = vunpack.c.h.b16 %v1485
        %v2241 = vunpack.c.l.b16 %v1486
        %v2242 = vunpack.c.h.b16 %v1486
        %v2243 = vunpack.c.l.b16 %v1487
        %v2244 = vunpack.c.h.b16 %v1487
        %v2245 = vunpack.c.l.b16 %v1488
        %v2246 = vunpack.c.h.b16 %v1488
        %v2247 = vunpack.c.l.b16 %v1489
        %v2248 = vunpack.c.h.b16 %v1489
        %v2249 = vunpack.c.l.b16 %v1490
        %v2250 = vunpack.c.h.b16 %v1490
        %v2251 = vunpack.c.l.b16 %v1491
        %v2252 = vunpack.c.h.b16 %v1491
        %v2253 = vunpack.c.l.b16 %v1492
        %v2254 = vunpack.c.h.b16 %v1492
        %v2255 = vunpack.c.l.b16 %v1493
        %v2256 = vunpack.c.h.b16 %v1493
        %v2257 = vunpack.c.l.b16 %v1494
        %v2258 = vunpack.c.h.b16 %v1494
        %v2259 = vunpack.c.l.b16 %v1495
        %v2260 = vunpack.c.h.b16 %v1495
        %v2261 = vunpack.c.l.b16 %v1496
        %v2262 = vunpack.c.h.b16 %v1496
        %v2263 = vunpack.c.l.b16 %v1497
        %v2264 = vunpack.c.h.b16 %v1497
        %v2265 = vunpack.c.l.b16 %v1498
        %v2266 = vunpack.c.h.b16 %v1498
        %v2267 = vunpack.c.l.b16 %v1499
        %v2268 = vunpack.c.h.b16 %v1499
        %v2269 = vunpack.c.l.b16 %v1500
        %v2270 = vunpack.c.h.b16 %v1500
        %v2271 = vunpack.c.l.b16 %v1501
        %v2272 = vunpack.c.h.b16 %v1501
        %v2273 = vunpack.c.l.b16 %v1502
        %v2274 = vunpack.c.h.b16 %v1502
        %v2275 = vunpack.c.l.b16 %v1503
        %v2276 = vunpack.c.h.b16 %v1503
        %v2277 = vunpack.c.l.b16 %v1504
        %v2278 = vunpack.c.h.b16 %v1504
        %v2279 = vunpack.c.l.b16 %v1505
        %v2280 = vunpack.c.h.b16 %v1505
        %v2281 = vunpack.c.l.b16 %v1506
        %v2282 = vunpack.c.h.b16 %v1506
        %v2283 = vunpack.c.l.b16 %v1507
        %v2284 = vunpack.c.h.b16 %v1507
        %v2285 = vunpack.c.l.b16 %v1508
        %v2286 = vunpack.c.h.b16 %v1508
        %v2287 = vunpack.c.l.b16 %v1509
        %v2288 = vunpack.c.h.b16 %v1509
        %v2289 = vunpack.c.l.b16 %v1510
        %v2290 = vunpack.c.h.b16 %v1510
        %v2291 = vunpack.c.l.b16 %v1511
        %v2292 = vunpack.c.h.b16 %v1511
        %v2293 = vunpack.c.l.b16 %v1512
        %v2294 = vunpack.c.h.b16 %v1512
        %v2295 = vunpack.c.l.b16 %v1513
        %v2296 = vunpack.c.h.b16 %v1513
        %v2297 = vunpack.c.l.b16 %v1514
        %v2298 = vunpack.c.h.b16 %v1514
        %v2299 = vunpack.c.l.b16 %v1515
        %v2300 = vunpack.c.h.b16 %v1515
        %v2301 = vunpack.c.l.b16 %v1516
        %v2302 = vunpack.c.h.b16 %v1516
        %v2303 = vunpack.c.l.b16 %v1517
        %v2304 = vunpack.c.h.b16 %v1517
        %v2305 = vunpack.c.l.b16 %v1518
        %v2306 = vunpack.c.h.b16 %v1518
        %v2307 = vunpack.c.l.b16 %v1519
        %v2308 = vunpack.c.h.b16 %v1519
        %v2309 = vunpack.c.l.b16 %v1520
        %v2310 = vunpack.c.h.b16 %v1520
        %v2311 = vunpack.c.l.b16 %v1521
        %v2312 = vunpack.c.h.b16 %v1521
        %v2313 = vunpack.c.l.b16 %v1522
        %v2314 = vunpack.c.h.b16 %v1522
        %v2315 = vunpack.c.l.b16 %v1523
        %v2316 = vunpack.c.h.b16 %v1523
        %v2317 = vunpack.c.l.b16 %v1524
        %v2318 = vunpack.c.h.b16 %v1524
        %v2319 = vunpack.c.l.b16 %v1525
        %v2320 = vunpack.c.h.b16 %v1525
        %v2321 = vunpack.c.l.b16 %v1526
        %v2322 = vunpack.c.h.b16 %v1526
        %v2323 = vunpack.c.l.b16 %v1527
        %v2324 = vunpack.c.h.b16 %v1527
        %v2325 = vunpack.c.l.b16 %v1528
        %v2326 = vunpack.c.h.b16 %v1528
        %v2327 = vunpack.c.l.b16 %v1529
        %v2328 = vunpack.c.h.b16 %v1529
        %v2329 = vunpack.c.l.b16 %v1530
        %v2330 = vunpack.c.h.b16 %v1530
        %v2331 = vpack.c.b16 %v2079, %v2075
        %v2332 = vpack.c.b16 %v2080, %v2076
        %v2333 = vpack.c.b16 %v2081, %v2077
        %v2334 = vpack.c.b16 %v2082, %v2078
        %v2335 = vpack.c.b16 %v2087, %v2083
        %v2336 = vpack.c.b16 %v2088, %v2084
        %v2337 = vpack.c.b16 %v2089, %v2085
        %v2338 = vpack.c.b16 %v2090, %v2086
        %v2339 = vpack.c.b16 %v2095, %v2091
        %v2340 = vpack.c.b16 %v2096, %v2092
        %v2341 = vpack.c.b16 %v2097, %v2093
        %v2342 = vpack.c.b16 %v2098, %v2094
        %v2343 = vpack.c.b16 %v2103, %v2099
        %v2344 = vpack.c.b16 %v2104, %v2100
        %v2345 = vpack.c.b16 %v2105, %v2101
        %v2346 = vpack.c.b16 %v2106, %v2102
        %v2347 = vpack.c.b16 %v2111, %v2107
        %v2348 = vpack.c.b16 %v2112, %v2108
        %v2349 = vpack.c.b16 %v2113, %v2109
        %v2350 = vpack.c.b16 %v2114, %v2110
        %v2351 = vpack.c.b16 %v2119, %v2115
        %v2352 = vpack.c.b16 %v2120, %v2116
        %v2353 = vpack.c.b16 %v2121, %v2117
        %v2354 = vpack.c.b16 %v2122, %v2118
        %v2355 = vpack.c.b16 %v2127, %v2123
        %v2356 = vpack.c.b16 %v2128, %v2124
        %v2357 = vpack.c.b16 %v2129, %v2125
        %v2358 = vpack.c.b16 %v2130, %v2126
        %v2359 = vpack.c.b16 %v2135, %v2131
        %v2360 = vpack.c.b16 %v2136, %v2132
        %v2361 = vpack.c.b16 %v2137, %v2133
        %v2362 = vpack.c.b16 %v2138, %v2134
        %v2363 = vpack.c.b16 %v2143, %v2139
        %v2364 = vpack.c.b16 %v2144, %v2140
        %v2365 = vpack.c.b16 %v2145, %v2141
        %v2366 = vpack.c.b16 %v2146, %v2142
        %v2367 = vpack.c.b16 %v2151, %v2147
        %v2368 = vpack.c.b16 %v2152, %v2148
        %v2369 = vpack.c.b16 %v2153, %v2149
        %v2370 = vpack.c.b16 %v2154, %v2150
        %v2371 = vpack.c.b16 %v2159, %v2155
        %v2372 = vpack.c.b16 %v2160, %v2156
        %v2373 = vpack.c.b16 %v2161, %v2157
        %v2374 = vpack.c.b16 %v2162, %v2158
        %v2375 = vpack.c.b16 %v2167, %v2163
        %v2376 = vpack.c.b16 %v2168, %v2164
        %v2377 = vpack.c.b16 %v2169, %v2165
        %v2378 = vpack.c.b16 %v2170, %v2166
        %v2379 = vpack.c.b16 %v2175, %v2171
        %v2380 = vpack.c.b16 %v2176, %v2172
        %v2381 = vpack.c.b16 %v2177, %v2173
        %v2382 = vpack.c.b16 %v2178, %v2174
        %v2383 = vpack.c.b16 %v2183, %v2179
        %v2384 = vpack.c.b16 %v2184, %v2180
        %v2385 = vpack.c.b16 %v2185, %v2181
        %v2386 = vpack.c.b16 %v2186, %v2182
        %v2387 = vpack.c.b16 %v2191, %v2187
        %v2388 = vpack.c.b16 %v2192, %v2188
        %v2389 = vpack.c.b16 %v2193, %v2189
        %v2390 = vpack.c.b16 %v2194, %v2190
        %v2391 = vpack.c.b16 %v2199, %v2195
        %v2392 = vpack.c.b16 %v2200, %v2196
        %v2393 = vpack.c.b16 %v2201, %v2197
        %v2394 = vpack.c.b16 %v2202, %v2198
        %v2395 = vpack.c.b16 %v2207, %v2203
        %v2396 = vpack.c.b16 %v2208, %v2204
        %v2397 = vpack.c.b16 %v2209, %v2205
        %v2398 = vpack.c.b16 %v2210, %v2206
        %v2399 = vpack.c.b16 %v2215, %v2211
        %v2400 = vpack.c.b16 %v2216, %v2212
        %v2401 = vpack.c.b16 %v2217, %v2213
        %v2402 = vpack.c.b16 %v2218, %v2214
        %v2403 = vpack.c.b16 %v2223, %v2219
        %v2404 = vpack.c.b16 %v2224, %v2220
        %v2405 = vpack.c.b16 %v2225, %v2221
        %v2406 = vpack.c.b16 %v2226, %v2222
        %v2407 = vpack.c.b16 %v2231, %v2227
        %v2408 = vpack.c.b16 %v2232, %v2228
        %v2409 = vpack.c.b16 %v2233, %v2229
        %v2410 = vpack.c.b16 %v2234, %v2230
        %v2411 = vpack.c.b16 %v2239, %v2235
        %v2412 = vpack.c.b16 %v2240, %v2236
        %v2413 = vpack.c.b16 %v2241, %v2237
        %v2414 = vpack.c.b16 %v2242, %v2238
        %v2415 = vpack.c.b16 %v2247, %v2243
        %v2416 = vpack.c.b16 %v2248, %v2244
        %v2417 = vpack.c.b16 %v2249, %v2245
        %v2418 = vpack.c.b16 %v2250, %v2246
        %v2419 = vpack.c.b16 %v2255, %v2251
        %v2420 = vpack.c.b16 %v2256, %v2252
        %v2421 = vpack.c.b16 %v2257, %v2253
        %v2422 = vpack.c.b16 %v2258, %v2254
        %v2423 = vpack.c.b16 %v2263, %v2259
        %v2424 = vpack.c.b16 %v2264, %v2260
        %v2425 = vpack.c.b16 %v2265, %v2261
        %v2426 = vpack.c.b16 %v2266, %v2262
        %v2427 = vpack.c.b16 %v2271, %v2267
        %v2428 = vpack.c.b16 %v2272, %v2268
        %v2429 = vpack.c.b16 %v2273, %v2269
        %v2430 = vpack.c.b16 %v2274, %v2270
        %v2431 = vpack.c.b16 %v2279, %v2275
        %v2432 = vpack.c.b16 %v2280, %v2276
        %v2433 = vpack.c.b16 %v2281, %v2277
        %v2434 = vpack.c.b16 %v2282, %v2278
        %v2435 = vpack.c.b16 %v2287, %v2283
        %v2436 = vpack.c.b16 %v2288, %v2284
        %v2437 = vpack.c.b16 %v2289, %v2285
        %v2438 = vpack.c.b16 %v2290, %v2286
        %v2439 = vpack.c.b16 %v2295, %v2291
        %v2440 = vpack.c.b16 %v2296, %v2292
        %v2441 = vpack.c.b16 %v2297, %v2293
        %v2442 = vpack.c.b16 %v2298, %v2294
        %v2443 = vpack.c.b16 %v2303, %v2299
        %v2444 = vpack.c.b16 %v2304, %v2300
        %v2445 = vpack.c.b16 %v2305, %v2301
        %v2446 = vpack.c.b16 %v2306, %v2302
        %v2447 = vpack.c.b16 %v2311, %v2307
        %v2448 = vpack.c.b16 %v2312, %v2308
        %v2449 = vpack.c.b16 %v2313, %v2309
        %v2450 = vpack.c.b16 %v2314, %v2310
        %v2451 = vpack.c.b16 %v2319, %v2315
        %v2452 = vpack.c.b16 %v2320, %v2316
        %v2453 = vpack.c.b16 %v2321, %v2317
        %v2454 = vpack.c.b16 %v2322, %v2318
        %v2455 = vpack.c.b16 %v2327, %v2323
        %v2456 = vpack.c.b16 %v2328, %v2324
        %v2457 = vpack.c.b16 %v2329, %v2325
        %v2458 = vpack.c.b16 %v2330, %v2326
        %2587 = vmatprep.subr.bf16.mxu0 0
        %2588 = vmatpush1.bf16.msra.mxu0 %v1531
        %2589 = vmatprep.subr.bf16.mxu0 0
        %2590 = vmatpush1.bf16.msra.mxu0 %v1532
        %2591 = vmatprep.subr.bf16.mxu0 0
        %2592 = vmatpush1.bf16.msra.mxu0 %v1533
        %2593 = vmatprep.subr.bf16.mxu0 0
        %2594 = vmatpush1.bf16.msra.mxu0 %v1534
        %2595 = vmatprep.subr.bf16.mxu0 0
        %2596 = vmatpush1.bf16.msra.mxu0 %v1535
        %2597 = vmatprep.subr.bf16.mxu0 0
        %2598 = vmatpush1.bf16.msra.mxu0 %v1536
        %2599 = vmatprep.subr.bf16.mxu0 0
        %2600 = vmatpush1.bf16.msra.mxu0 %v1537
        %2601 = vmatprep.subr.bf16.mxu0 0
        %2602 = vmatpush1.bf16.msra.mxu0 %v1538
        %2603 = vmatprep.subr.bf16.mxu0 0
        %2604 = vmatpush1.bf16.msra.mxu0 %v1539
        %2605 = vmatprep.subr.bf16.mxu0 0
        %2606 = vmatpush1.bf16.msra.mxu0 %v1540
        %2607 = vmatprep.subr.bf16.mxu0 0
        %2608 = vmatpush1.bf16.msra.mxu0 %v1541
        %2609 = vmatprep.subr.bf16.mxu0 0
        %2610 = vmatpush1.bf16.msra.mxu0 %v1542
        %2611 = vmatprep.subr.bf16.mxu0 0
        %2612 = vmatpush1.bf16.msra.mxu0 %v1543
        %2613 = vmatprep.subr.bf16.mxu0 0
        %2614 = vmatpush1.bf16.msra.mxu0 %v1544
        %2615 = vmatprep.subr.bf16.mxu0 0
        %2616 = vmatpush1.bf16.msra.mxu0 %v1545
        %2617 = vmatprep.subr.bf16.mxu0 0
        %2618 = vmatpush1.bf16.msra.mxu0 %v1546
        %2619 = vmatprep.mubr.bf16.mxu0 %v2332
        %2620 = vmatmul.mubr.bf16.gmra.mrb[0].mxu0 %v2331
        %v2621 = vpop.f32.mrb[0].mxu0
        %v2622 = vadd.f32 %v1630, %v2621
        %v2623 = vpop.f32.mrb[0].mxu0
        %v2624 = vpop.f32.mrb[0].mxu0
        %v2625 = vadd.f32 %v1635, %v2624
        %v2626 = vpop.f32.mrb[0].mxu0
        %2627 = vmatprep.mubr.bf16.mxu0 %v2336
        %2628 = vmatmul.mubr.bf16.gmra.mrb[0].mxu0 %v2335
        %v2629 = vpop.f32.mrb[0].mxu0
        %v2630 = vadd.f32 %v1640, %v2629
        %v2631 = vpop.f32.mrb[0].mxu0
        %v2632 = vpop.f32.mrb[0].mxu0
        %v2633 = vadd.f32 %v1645, %v2632
        %v2634 = vpop.f32.mrb[0].mxu0
        %2635 = vmatprep.mubr.bf16.mxu0 %v2340
        %2636 = vmatmul.mubr.bf16.gmra.mrb[0].mxu0 %v2339
        %v2637 = vpop.f32.mrb[0].mxu0
        %v2638 = vadd.f32 %v1650, %v2637
        %v2639 = vpop.f32.mrb[0].mxu0
        %v2640 = vpop.f32.mrb[0].mxu0
        %v2641 = vadd.f32 %v1655, %v2640
        %v2642 = vpop.f32.mrb[0].mxu0
        %2643 = vmatprep.mubr.bf16.mxu0 %v2344
        %2644 = vmatmul.mubr.bf16.gmra.mrb[0].mxu0 %v2343
        %v2645 = vpop.f32.mrb[0].mxu0
        %v2646 = vadd.f32 %v1660, %v2645
        %v2647 = vpop.f32.mrb[0].mxu0
        %v2648 = vpop.f32.mrb[0].mxu0
        %v2649 = vadd.f32 %v1665, %v2648
        %v2650 = vpop.f32.mrb[0].mxu0
        %2651 = vmatprep.mubr.bf16.mxu0 %v2348
        %2652 = vmatmul.mubr.bf16.gmra.mrb[0].mxu0 %v2347
        %v2653 = vpop.f32.mrb[0].mxu0
        %v2654 = vadd.f32 %v1670, %v2653
        %v2655 = vpop.f32.mrb[0].mxu0
        %v2656 = vpop.f32.mrb[0].mxu0
        %v2657 = vadd.f32 %v1675, %v2656
        %v2658 = vpop.f32.mrb[0].mxu0
        %2659 = vmatprep.mubr.bf16.mxu0 %v2352
        %2660 = vmatmul.mubr.bf16.gmra.mrb[0].mxu0 %v2351
        %v2661 = vpop.f32.mrb[0].mxu0
        %v2662 = vadd.f32 %v1680, %v2661
        %v2663 = vpop.f32.mrb[0].mxu0
        %v2664 = vpop.f32.mrb[0].mxu0
        %v2665 = vadd.f32 %v1685, %v2664
        %v2666 = vpop.f32.mrb[0].mxu0
        %2667 = vmatprep.mubr.bf16.mxu0 %v2356
        %2668 = vmatmul.mubr.bf16.gmra.mrb[0].mxu0 %v2355
        %v2669 = vpop.f32.mrb[0].mxu0
        %v2670 = vadd.f32 %v1690, %v2669
        %v2671 = vpop.f32.mrb[0].mxu0
        %v2672 = vpop.f32.mrb[0].mxu0
        %v2673 = vadd.f32 %v1695, %v2672
        %v2674 = vpop.f32.mrb[0].mxu0
        %2675 = vmatprep.mubr.bf16.mxu0 %v2360
        %2676 = vmatmul.mubr.bf16.gmra.mrb[0].mxu0 %v2359
        %v2677 = vpop.f32.mrb[0].mxu0
        %v2678 = vadd.f32 %v1700, %v2677
        %v2679 = vpop.f32.mrb[0].mxu0
        %v2680 = vpop.f32.mrb[0].mxu0
        %v2681 = vadd.f32 %v1705, %v2680
        %v2682 = vpop.f32.mrb[0].mxu0
        %2683 = vmatprep.mubr.bf16.mxu0 %v2364
        %2684 = vmatmul.mubr.bf16.gmra.mrb[0].mxu0 %v2363
        %v2685 = vpop.f32.mrb[0].mxu0
        %v2686 = vadd.f32 %v1710, %v2685
        %v2687 = vpop.f32.mrb[0].mxu0
        %v2688 = vpop.f32.mrb[0].mxu0
        %v2689 = vadd.f32 %v1715, %v2688
        %v2690 = vpop.f32.mrb[0].mxu0
        %2691 = vmatprep.mubr.bf16.mxu0 %v2368
        %2692 = vmatmul.mubr.bf16.gmra.mrb[0].mxu0 %v2367
        %v2693 = vpop.f32.mrb[0].mxu0
        %v2694 = vadd.f32 %v1720, %v2693
        %v2695 = vpop.f32.mrb[0].mxu0
        %v2696 = vpop.f32.mrb[0].mxu0
        %v2697 = vadd.f32 %v1725, %v2696
        %v2698 = vpop.f32.mrb[0].mxu0
        %2699 = vmatprep.mubr.bf16.mxu0 %v2372
        %2700 = vmatmul.mubr.bf16.gmra.mrb[0].mxu0 %v2371
        %v2701 = vpop.f32.mrb[0].mxu0
        %v2702 = vadd.f32 %v1730, %v2701
        %v2703 = vpop.f32.mrb[0].mxu0
        %v2704 = vpop.f32.mrb[0].mxu0
        %v2705 = vadd.f32 %v1735, %v2704
        %v2706 = vpop.f32.mrb[0].mxu0
        %2707 = vmatprep.mubr.bf16.mxu0 %v2376
        %2708 = vmatmul.mubr.bf16.gmra.mrb[0].mxu0 %v2375
        %v2709 = vpop.f32.mrb[0].mxu0
        %v2710 = vadd.f32 %v1740, %v2709
        %v2711 = vpop.f32.mrb[0].mxu0
        %v2712 = vpop.f32.mrb[0].mxu0
        %v2713 = vadd.f32 %v1745, %v2712
        %v2714 = vpop.f32.mrb[0].mxu0
        %2715 = vmatprep.mubr.bf16.mxu0 %v2380
        %2716 = vmatmul.mubr.bf16.gmra.mrb[0].mxu0 %v2379
        %v2717 = vpop.f32.mrb[0].mxu0
        %v2718 = vadd.f32 %v1750, %v2717
        %v2719 = vpop.f32.mrb[0].mxu0
        %v2720 = vpop.f32.mrb[0].mxu0
        %v2721 = vadd.f32 %v1755, %v2720
        %v2722 = vpop.f32.mrb[0].mxu0
        %2723 = vmatprep.mubr.bf16.mxu0 %v2384
        %2724 = vmatmul.mubr.bf16.gmra.mrb[0].mxu0 %v2383
        %v2725 = vpop.f32.mrb[0].mxu0
        %v2726 = vadd.f32 %v1760, %v2725
        %v2727 = vpop.f32.mrb[0].mxu0
        %v2728 = vpop.f32.mrb[0].mxu0
        %v2729 = vadd.f32 %v1765, %v2728
        %v2730 = vpop.f32.mrb[0].mxu0
        %2731 = vmatprep.mubr.bf16.mxu0 %v2388
        %2732 = vmatmul.mubr.bf16.gmra.mrb[0].mxu0 %v2387
        %v2733 = vpop.f32.mrb[0].mxu0
        %v2734 = vadd.f32 %v1770, %v2733
        %v2735 = vpop.f32.mrb[0].mxu0
        %v2736 = vpop.f32.mrb[0].mxu0
        %v2737 = vadd.f32 %v1775, %v2736
        %v2738 = vpop.f32.mrb[0].mxu0
        %2739 = vmatprep.mubr.bf16.mxu0 %v2392
        %2740 = vmatmul.mubr.bf16.gmra.mrb[0].mxu0 %v2391
        %v2741 = vpop.f32.mrb[0].mxu0
        %v2742 = vadd.f32 %v1780, %v2741
        %v2743 = vpop.f32.mrb[0].mxu0
        %v2744 = vpop.f32.mrb[0].mxu0
        %v2745 = vadd.f32 %v1785, %v2744
        %v2746 = vpop.f32.mrb[0].mxu0
        %2747 = vmatprep.mubr.bf16.mxu0 %v2396
        %2748 = vmatmul.mubr.bf16.gmra.mrb[0].mxu0 %v2395
        %v2749 = vpop.f32.mrb[0].mxu0
        %v2750 = vadd.f32 %v1790, %v2749
        %v2751 = vpop.f32.mrb[0].mxu0
        %v2752 = vpop.f32.mrb[0].mxu0
        %v2753 = vadd.f32 %v1795, %v2752
        %v2754 = vpop.f32.mrb[0].mxu0
        %2755 = vmatprep.mubr.bf16.mxu0 %v2400
        %2756 = vmatmul.mubr.bf16.gmra.mrb[0].mxu0 %v2399
        %v2757 = vpop.f32.mrb[0].mxu0
        %v2758 = vadd.f32 %v1800, %v2757
        %v2759 = vpop.f32.mrb[0].mxu0
        %v2760 = vpop.f32.mrb[0].mxu0
        %v2761 = vadd.f32 %v1805, %v2760
        %v2762 = vpop.f32.mrb[0].mxu0
        %2763 = vmatprep.mubr.bf16.mxu0 %v2404
        %2764 = vmatmul.mubr.bf16.gmra.mrb[0].mxu0 %v2403
        %v2765 = vpop.f32.mrb[0].mxu0
        %v2766 = vadd.f32 %v1810, %v2765
        %v2767 = vpop.f32.mrb[0].mxu0
        %v2768 = vpop.f32.mrb[0].mxu0
        %v2769 = vadd.f32 %v1815, %v2768
        %v2770 = vpop.f32.mrb[0].mxu0
        %2771 = vmatprep.mubr.bf16.mxu0 %v2408
        %2772 = vmatmul.mubr.bf16.gmra.mrb[0].mxu0 %v2407
        %v2773 = vpop.f32.mrb[0].mxu0
        %v2774 = vadd.f32 %v1820, %v2773
        %v2775 = vpop.f32.mrb[0].mxu0
        %v2776 = vpop.f32.mrb[0].mxu0
        %v2777 = vadd.f32 %v1825, %v2776
        %v2778 = vpop.f32.mrb[0].mxu0
        %2779 = vmatprep.mubr.bf16.mxu0 %v2412
        %2780 = vmatmul.mubr.bf16.gmra.mrb[0].mxu0 %v2411
        %v2781 = vpop.f32.mrb[0].mxu0
        %v2782 = vadd.f32 %v1830, %v2781
        %v2783 = vpop.f32.mrb[0].mxu0
        %v2784 = vpop.f32.mrb[0].mxu0
        %v2785 = vadd.f32 %v1835, %v2784
        %v2786 = vpop.f32.mrb[0].mxu0
        %2787 = vmatprep.mubr.bf16.mxu0 %v2416
        %2788 = vmatmul.mubr.bf16.gmra.mrb[0].mxu0 %v2415
        %v2789 = vpop.f32.mrb[0].mxu0
        %v2790 = vadd.f32 %v1840, %v2789
        %v2791 = vpop.f32.mrb[0].mxu0
        %v2792 = vpop.f32.mrb[0].mxu0
        %v2793 = vadd.f32 %v1845, %v2792
        %v2794 = vpop.f32.mrb[0].mxu0
        %2795 = vmatprep.mubr.bf16.mxu0 %v2420
        %2796 = vmatmul.mubr.bf16.gmra.mrb[0].mxu0 %v2419
        %v2797 = vpop.f32.mrb[0].mxu0
        %v2798 = vadd.f32 %v1850, %v2797
        %v2799 = vpop.f32.mrb[0].mxu0
        %v2800 = vpop.f32.mrb[0].mxu0
        %v2801 = vadd.f32 %v1855, %v2800
        %v2802 = vpop.f32.mrb[0].mxu0
        %2803 = vmatprep.mubr.bf16.mxu0 %v2424
        %2804 = vmatmul.mubr.bf16.gmra.mrb[0].mxu0 %v2423
        %v2805 = vpop.f32.mrb[0].mxu0
        %v2806 = vadd.f32 %v1860, %v2805
        %v2807 = vpop.f32.mrb[0].mxu0
        %v2808 = vpop.f32.mrb[0].mxu0
        %v2809 = vadd.f32 %v1865, %v2808
        %v2810 = vpop.f32.mrb[0].mxu0
        %2811 = vmatprep.mubr.bf16.mxu0 %v2428
        %2812 = vmatmul.mubr.bf16.gmra.mrb[0].mxu0 %v2427
        %v2813 = vpop.f32.mrb[0].mxu0
        %v2814 = vadd.f32 %v1870, %v2813
        %v2815 = vpop.f32.mrb[0].mxu0
        %v2816 = vpop.f32.mrb[0].mxu0
        %v2817 = vadd.f32 %v1875, %v2816
        %v2818 = vpop.f32.mrb[0].mxu0
        %2819 = vmatprep.mubr.bf16.mxu0 %v2432
        %2820 = vmatmul.mubr.bf16.gmra.mrb[0].mxu0 %v2431
        %v2821 = vpop.f32.mrb[0].mxu0
        %v2822 = vadd.f32 %v1880, %v2821
        %v2823 = vpop.f32.mrb[0].mxu0
        %v2824 = vpop.f32.mrb[0].mxu0
        %v2825 = vadd.f32 %v1885, %v2824
        %v2826 = vpop.f32.mrb[0].mxu0
        %2827 = vmatprep.mubr.bf16.mxu0 %v2436
        %2828 = vmatmul.mubr.bf16.gmra.mrb[0].mxu0 %v2435
        %v2829 = vpop.f32.mrb[0].mxu0
        %v2830 = vadd.f32 %v1890, %v2829
        %v2831 = vpop.f32.mrb[0].mxu0
        %v2832 = vpop.f32.mrb[0].mxu0
        %v2833 = vadd.f32 %v1895, %v2832
        %v2834 = vpop.f32.mrb[0].mxu0
        %2835 = vmatprep.mubr.bf16.mxu0 %v2440
        %2836 = vmatmul.mubr.bf16.gmra.mrb[0].mxu0 %v2439
        %v2837 = vpop.f32.mrb[0].mxu0
        %v2838 = vadd.f32 %v1900, %v2837
        %v2839 = vpop.f32.mrb[0].mxu0
        %v2840 = vpop.f32.mrb[0].mxu0
        %v2841 = vadd.f32 %v1905, %v2840
        %v2842 = vpop.f32.mrb[0].mxu0
        %2843 = vmatprep.mubr.bf16.mxu0 %v2444
        %2844 = vmatmul.mubr.bf16.gmra.mrb[0].mxu0 %v2443
        %v2845 = vpop.f32.mrb[0].mxu0
        %v2846 = vadd.f32 %v1910, %v2845
        %v2847 = vpop.f32.mrb[0].mxu0
        %v2848 = vpop.f32.mrb[0].mxu0
        %v2849 = vadd.f32 %v1915, %v2848
        %v2850 = vpop.f32.mrb[0].mxu0
        %2851 = vmatprep.mubr.bf16.mxu0 %v2448
        %2852 = vmatmul.mubr.bf16.gmra.mrb[0].mxu0 %v2447
        %v2853 = vpop.f32.mrb[0].mxu0
        %v2854 = vadd.f32 %v1920, %v2853
        %v2855 = vpop.f32.mrb[0].mxu0
        %v2856 = vpop.f32.mrb[0].mxu0
        %v2857 = vadd.f32 %v1925, %v2856
        %v2858 = vpop.f32.mrb[0].mxu0
        %2859 = vmatprep.mubr.bf16.mxu0 %v2452
        %2860 = vmatmul.mubr.bf16.gmra.mrb[0].mxu0 %v2451
        %v2861 = vpop.f32.mrb[0].mxu0
        %v2862 = vadd.f32 %v1930, %v2861
        %v2863 = vpop.f32.mrb[0].mxu0
        %v2864 = vpop.f32.mrb[0].mxu0
        %v2865 = vadd.f32 %v1935, %v2864
        %v2866 = vpop.f32.mrb[0].mxu0
        %2867 = vmatprep.mubr.bf16.mxu0 %v2456
        %2868 = vmatmul.mubr.bf16.gmra.mrb[0].mxu0 %v2455
        %v2869 = vpop.f32.mrb[0].mxu0
        %v2870 = vadd.f32 %v1940, %v2869
        %v2871 = vpop.f32.mrb[0].mxu0
        %v2872 = vpop.f32.mrb[0].mxu0
        %v2873 = vadd.f32 %v1945, %v2872
        %v2874 = vpop.f32.mrb[0].mxu0
        %2875 = vdwg.mxu0
        %2876 = vmatprep.subr.bf16.mxu0 0
        %2877 = vmatpush1.bf16.msra.mxu0 %v1547
        %2878 = vmatprep.subr.bf16.mxu0 0
        %2879 = vmatpush1.bf16.msra.mxu0 %v1548
        %2880 = vmatprep.subr.bf16.mxu0 0
        %2881 = vmatpush1.bf16.msra.mxu0 %v1549
        %2882 = vmatprep.subr.bf16.mxu0 0
        %2883 = vmatpush1.bf16.msra.mxu0 %v1550
        %2884 = vmatprep.subr.bf16.mxu0 0
        %2885 = vmatpush1.bf16.msra.mxu0 %v1551
        %2886 = vmatprep.subr.bf16.mxu0 0
        %2887 = vmatpush1.bf16.msra.mxu0 %v1552
        %2888 = vmatprep.subr.bf16.mxu0 0
        %2889 = vmatpush1.bf16.msra.mxu0 %v1553
        %2890 = vmatprep.subr.bf16.mxu0 0
        %2891 = vmatpush1.bf16.msra.mxu0 %v1554
        %2892 = vmatprep.subr.bf16.mxu0 0
        %2893 = vmatpush1.bf16.msra.mxu0 %v1555
        %2894 = vmatprep.subr.bf16.mxu0 0
        %2895 = vmatpush1.bf16.msra.mxu0 %v1556
        %2896 = vmatprep.subr.bf16.mxu0 0
        %2897 = vmatpush1.bf16.msra.mxu0 %v1557
        %2898 = vmatprep.subr.bf16.mxu0 0
        %2899 = vmatpush1.bf16.msra.mxu0 %v1558
        %2900 = vmatprep.subr.bf16.mxu0 0
        %2901 = vmatpush1.bf16.msra.mxu0 %v1559
        %2902 = vmatprep.subr.bf16.mxu0 0
        %2903 = vmatpush1.bf16.msra.mxu0 %v1560
        %2904 = vmatprep.subr.bf16.mxu0 0
        %2905 = vmatpush1.bf16.msra.mxu0 %v1561
        %2906 = vmatprep.subr.bf16.mxu0 0
        %2907 = vmatpush1.bf16.msra.mxu0 %v1562
        %2908 = vmatprep.mubr.bf16.mxu0 %v2334
        %2909 = vmatmul.mubr.bf16.gmra.mrb[0].mxu0 %v2333
        %v2910 = vpop.f32.mrb[0].mxu0
        %v2911 = vadd.f32 %v2622, %v2910
        %v2912 = vpop.f32.mrb[0].mxu0
        %v2913 = vpop.f32.mrb[0].mxu0
        %v2914 = vadd.f32 %v2625, %v2913
        %v2915 = vpop.f32.mrb[0].mxu0
        %2916 = vmatprep.mubr.bf16.mxu0 %v2338
        %2917 = vmatmul.mubr.bf16.gmra.mrb[0].mxu0 %v2337
        %v2918 = vpop.f32.mrb[0].mxu0
        %v2919 = vadd.f32 %v2630, %v2918
        %v2920 = vpop.f32.mrb[0].mxu0
        %v2921 = vpop.f32.mrb[0].mxu0
        %v2922 = vadd.f32 %v2633, %v2921
        %v2923 = vpop.f32.mrb[0].mxu0
        %2924 = vmatprep.mubr.bf16.mxu0 %v2342
        %2925 = vmatmul.mubr.bf16.gmra.mrb[0].mxu0 %v2341
        %v2926 = vpop.f32.mrb[0].mxu0
        %v2927 = vadd.f32 %v2638, %v2926
        %v2928 = vpop.f32.mrb[0].mxu0
        %v2929 = vpop.f32.mrb[0].mxu0
        %v2930 = vadd.f32 %v2641, %v2929
        %v2931 = vpop.f32.mrb[0].mxu0
        %2932 = vmatprep.mubr.bf16.mxu0 %v2346
        %2933 = vmatmul.mubr.bf16.gmra.mrb[0].mxu0 %v2345
        %v2934 = vpop.f32.mrb[0].mxu0
        %v2935 = vadd.f32 %v2646, %v2934
        %v2936 = vpop.f32.mrb[0].mxu0
        %v2937 = vpop.f32.mrb[0].mxu0
        %v2938 = vadd.f32 %v2649, %v2937
        %v2939 = vpop.f32.mrb[0].mxu0
        %2940 = vmatprep.mubr.bf16.mxu0 %v2350
        %2941 = vmatmul.mubr.bf16.gmra.mrb[0].mxu0 %v2349
        %v2942 = vpop.f32.mrb[0].mxu0
        %v2943 = vadd.f32 %v2654, %v2942
        %v2944 = vpop.f32.mrb[0].mxu0
        %v2945 = vpop.f32.mrb[0].mxu0
        %v2946 = vadd.f32 %v2657, %v2945
        %v2947 = vpop.f32.mrb[0].mxu0
        %2948 = vmatprep.mubr.bf16.mxu0 %v2354
        %2949 = vmatmul.mubr.bf16.gmra.mrb[0].mxu0 %v2353
        %v2950 = vpop.f32.mrb[0].mxu0
        %v2951 = vadd.f32 %v2662, %v2950
        %v2952 = vpop.f32.mrb[0].mxu0
        %v2953 = vpop.f32.mrb[0].mxu0
        %v2954 = vadd.f32 %v2665, %v2953
        %v2955 = vpop.f32.mrb[0].mxu0
        %2956 = vmatprep.mubr.bf16.mxu0 %v2358
        %2957 = vmatmul.mubr.bf16.gmra.mrb[0].mxu0 %v2357
        %v2958 = vpop.f32.mrb[0].mxu0
        %v2959 = vadd.f32 %v2670, %v2958
        %v2960 = vpop.f32.mrb[0].mxu0
        %v2961 = vpop.f32.mrb[0].mxu0
        %v2962 = vadd.f32 %v2673, %v2961
        %v2963 = vpop.f32.mrb[0].mxu0
        %2964 = vmatprep.mubr.bf16.mxu0 %v2362
        %2965 = vmatmul.mubr.bf16.gmra.mrb[0].mxu0 %v2361
        %v2966 = vpop.f32.mrb[0].mxu0
        %v2967 = vadd.f32 %v2678, %v2966
        %v2968 = vpop.f32.mrb[0].mxu0
        %v2969 = vpop.f32.mrb[0].mxu0
        %v2970 = vadd.f32 %v2681, %v2969
        %v2971 = vpop.f32.mrb[0].mxu0
        %2972 = vmatprep.mubr.bf16.mxu0 %v2366
        %2973 = vmatmul.mubr.bf16.gmra.mrb[0].mxu0 %v2365
        %v2974 = vpop.f32.mrb[0].mxu0
        %v2975 = vadd.f32 %v2686, %v2974
        %v2976 = vpop.f32.mrb[0].mxu0
        %v2977 = vpop.f32.mrb[0].mxu0
        %v2978 = vadd.f32 %v2689, %v2977
        %v2979 = vpop.f32.mrb[0].mxu0
        %2980 = vmatprep.mubr.bf16.mxu0 %v2370
        %2981 = vmatmul.mubr.bf16.gmra.mrb[0].mxu0 %v2369
        %v2982 = vpop.f32.mrb[0].mxu0
        %v2983 = vadd.f32 %v2694, %v2982
        %v2984 = vpop.f32.mrb[0].mxu0
        %v2985 = vpop.f32.mrb[0].mxu0
        %v2986 = vadd.f32 %v2697, %v2985
        %v2987 = vpop.f32.mrb[0].mxu0
        %2988 = vmatprep.mubr.bf16.mxu0 %v2374
        %2989 = vmatmul.mubr.bf16.gmra.mrb[0].mxu0 %v2373
        %v2990 = vpop.f32.mrb[0].mxu0
        %v2991 = vadd.f32 %v2702, %v2990
        %v2992 = vpop.f32.mrb[0].mxu0
        %v2993 = vpop.f32.mrb[0].mxu0
        %v2994 = vadd.f32 %v2705, %v2993
        %v2995 = vpop.f32.mrb[0].mxu0
        %2996 = vmatprep.mubr.bf16.mxu0 %v2378
        %2997 = vmatmul.mubr.bf16.gmra.mrb[0].mxu0 %v2377
        %v2998 = vpop.f32.mrb[0].mxu0
        %v2999 = vadd.f32 %v2710, %v2998
        %v3000 = vpop.f32.mrb[0].mxu0
        %v3001 = vpop.f32.mrb[0].mxu0
        %v3002 = vadd.f32 %v2713, %v3001
        %v3003 = vpop.f32.mrb[0].mxu0
        %3004 = vmatprep.mubr.bf16.mxu0 %v2382
        %3005 = vmatmul.mubr.bf16.gmra.mrb[0].mxu0 %v2381
        %v3006 = vpop.f32.mrb[0].mxu0
        %v3007 = vadd.f32 %v2718, %v3006
        %v3008 = vpop.f32.mrb[0].mxu0
        %v3009 = vpop.f32.mrb[0].mxu0
        %v3010 = vadd.f32 %v2721, %v3009
        %v3011 = vpop.f32.mrb[0].mxu0
        %3012 = vmatprep.mubr.bf16.mxu0 %v2386
        %3013 = vmatmul.mubr.bf16.gmra.mrb[0].mxu0 %v2385
        %v3014 = vpop.f32.mrb[0].mxu0
        %v3015 = vadd.f32 %v2726, %v3014
        %v3016 = vpop.f32.mrb[0].mxu0
        %v3017 = vpop.f32.mrb[0].mxu0
        %v3018 = vadd.f32 %v2729, %v3017
        %v3019 = vpop.f32.mrb[0].mxu0
        %3020 = vmatprep.mubr.bf16.mxu0 %v2390
        %3021 = vmatmul.mubr.bf16.gmra.mrb[0].mxu0 %v2389
        %v3022 = vpop.f32.mrb[0].mxu0
        %v3023 = vadd.f32 %v2734, %v3022
        %v3024 = vpop.f32.mrb[0].mxu0
        %v3025 = vpop.f32.mrb[0].mxu0
        %v3026 = vadd.f32 %v2737, %v3025
        %v3027 = vpop.f32.mrb[0].mxu0
        %3028 = vmatprep.mubr.bf16.mxu0 %v2394
        %3029 = vmatmul.mubr.bf16.gmra.mrb[0].mxu0 %v2393
        %v3030 = vpop.f32.mrb[0].mxu0
        %v3031 = vadd.f32 %v2742, %v3030
        %v3032 = vpop.f32.mrb[0].mxu0
        %v3033 = vpop.f32.mrb[0].mxu0
        %v3034 = vadd.f32 %v2745, %v3033
        %v3035 = vpop.f32.mrb[0].mxu0
        %3036 = vmatprep.mubr.bf16.mxu0 %v2398
        %3037 = vmatmul.mubr.bf16.gmra.mrb[0].mxu0 %v2397
        %v3038 = vpop.f32.mrb[0].mxu0
        %v3039 = vadd.f32 %v2750, %v3038
        %v3040 = vpop.f32.mrb[0].mxu0
        %v3041 = vpop.f32.mrb[0].mxu0
        %v3042 = vadd.f32 %v2753, %v3041
        %v3043 = vpop.f32.mrb[0].mxu0
        %3044 = vmatprep.mubr.bf16.mxu0 %v2402
        %3045 = vmatmul.mubr.bf16.gmra.mrb[0].mxu0 %v2401
        %v3046 = vpop.f32.mrb[0].mxu0
        %v3047 = vadd.f32 %v2758, %v3046
        %v3048 = vpop.f32.mrb[0].mxu0
        %v3049 = vpop.f32.mrb[0].mxu0
        %v3050 = vadd.f32 %v2761, %v3049
        %v3051 = vpop.f32.mrb[0].mxu0
        %3052 = vmatprep.mubr.bf16.mxu0 %v2406
        %3053 = vmatmul.mubr.bf16.gmra.mrb[0].mxu0 %v2405
        %v3054 = vpop.f32.mrb[0].mxu0
        %v3055 = vadd.f32 %v2766, %v3054
        %v3056 = vpop.f32.mrb[0].mxu0
        %v3057 = vpop.f32.mrb[0].mxu0
        %v3058 = vadd.f32 %v2769, %v3057
        %v3059 = vpop.f32.mrb[0].mxu0
        %3060 = vmatprep.mubr.bf16.mxu0 %v2410
        %3061 = vmatmul.mubr.bf16.gmra.mrb[0].mxu0 %v2409
        %v3062 = vpop.f32.mrb[0].mxu0
        %v3063 = vadd.f32 %v2774, %v3062
        %v3064 = vpop.f32.mrb[0].mxu0
        %v3065 = vpop.f32.mrb[0].mxu0
        %v3066 = vadd.f32 %v2777, %v3065
        %v3067 = vpop.f32.mrb[0].mxu0
        %3068 = vmatprep.mubr.bf16.mxu0 %v2414
        %3069 = vmatmul.mubr.bf16.gmra.mrb[0].mxu0 %v2413
        %v3070 = vpop.f32.mrb[0].mxu0
        %v3071 = vadd.f32 %v2782, %v3070
        %v3072 = vpop.f32.mrb[0].mxu0
        %v3073 = vpop.f32.mrb[0].mxu0
        %v3074 = vadd.f32 %v2785, %v3073
        %v3075 = vpop.f32.mrb[0].mxu0
        %3076 = vmatprep.mubr.bf16.mxu0 %v2418
        %3077 = vmatmul.mubr.bf16.gmra.mrb[0].mxu0 %v2417
        %v3078 = vpop.f32.mrb[0].mxu0
        %v3079 = vadd.f32 %v2790, %v3078
        %v3080 = vpop.f32.mrb[0].mxu0
        %v3081 = vpop.f32.mrb[0].mxu0
        %v3082 = vadd.f32 %v2793, %v3081
        %v3083 = vpop.f32.mrb[0].mxu0
        %3084 = vmatprep.mubr.bf16.mxu0 %v2422
        %3085 = vmatmul.mubr.bf16.gmra.mrb[0].mxu0 %v2421
        %v3086 = vpop.f32.mrb[0].mxu0
        %v3087 = vadd.f32 %v2798, %v3086
        %v3088 = vpop.f32.mrb[0].mxu0
        %v3089 = vpop.f32.mrb[0].mxu0
        %v3090 = vadd.f32 %v2801, %v3089
        %v3091 = vpop.f32.mrb[0].mxu0
        %3092 = vmatprep.mubr.bf16.mxu0 %v2426
        %3093 = vmatmul.mubr.bf16.gmra.mrb[0].mxu0 %v2425
        %v3094 = vpop.f32.mrb[0].mxu0
        %v3095 = vadd.f32 %v2806, %v3094
        %v3096 = vpop.f32.mrb[0].mxu0
        %v3097 = vpop.f32.mrb[0].mxu0
        %v3098 = vadd.f32 %v2809, %v3097
        %v3099 = vpop.f32.mrb[0].mxu0
        %3100 = vmatprep.mubr.bf16.mxu0 %v2430
        %3101 = vmatmul.mubr.bf16.gmra.mrb[0].mxu0 %v2429
        %v3102 = vpop.f32.mrb[0].mxu0
        %v3103 = vadd.f32 %v2814, %v3102
        %v3104 = vpop.f32.mrb[0].mxu0
        %v3105 = vpop.f32.mrb[0].mxu0
        %v3106 = vadd.f32 %v2817, %v3105
        %v3107 = vpop.f32.mrb[0].mxu0
        %3108 = vmatprep.mubr.bf16.mxu0 %v2434
        %3109 = vmatmul.mubr.bf16.gmra.mrb[0].mxu0 %v2433
        %v3110 = vpop.f32.mrb[0].mxu0
        %v3111 = vadd.f32 %v2822, %v3110
        %v3112 = vpop.f32.mrb[0].mxu0
        %v3113 = vpop.f32.mrb[0].mxu0
        %v3114 = vadd.f32 %v2825, %v3113
        %v3115 = vpop.f32.mrb[0].mxu0
        %3116 = vmatprep.mubr.bf16.mxu0 %v2438
        %3117 = vmatmul.mubr.bf16.gmra.mrb[0].mxu0 %v2437
        %v3118 = vpop.f32.mrb[0].mxu0
        %v3119 = vadd.f32 %v2830, %v3118
        %v3120 = vpop.f32.mrb[0].mxu0
        %v3121 = vpop.f32.mrb[0].mxu0
        %v3122 = vadd.f32 %v2833, %v3121
        %v3123 = vpop.f32.mrb[0].mxu0
        %3124 = vmatprep.mubr.bf16.mxu0 %v2442
        %3125 = vmatmul.mubr.bf16.gmra.mrb[0].mxu0 %v2441
        %v3126 = vpop.f32.mrb[0].mxu0
        %v3127 = vadd.f32 %v2838, %v3126
        %v3128 = vpop.f32.mrb[0].mxu0
        %v3129 = vpop.f32.mrb[0].mxu0
        %v3130 = vadd.f32 %v2841, %v3129
        %v3131 = vpop.f32.mrb[0].mxu0
        %3132 = vmatprep.mubr.bf16.mxu0 %v2446
        %3133 = vmatmul.mubr.bf16.gmra.mrb[0].mxu0 %v2445
        %v3134 = vpop.f32.mrb[0].mxu0
        %v3135 = vadd.f32 %v2846, %v3134
        %v3136 = vpop.f32.mrb[0].mxu0
        %v3137 = vpop.f32.mrb[0].mxu0
        %v3138 = vadd.f32 %v2849, %v3137
        %v3139 = vpop.f32.mrb[0].mxu0
        %3140 = vmatprep.mubr.bf16.mxu0 %v2450
        %3141 = vmatmul.mubr.bf16.gmra.mrb[0].mxu0 %v2449
        %v3142 = vpop.f32.mrb[0].mxu0
        %v3143 = vadd.f32 %v2854, %v3142
        %v3144 = vpop.f32.mrb[0].mxu0
        %v3145 = vpop.f32.mrb[0].mxu0
        %v3146 = vadd.f32 %v2857, %v3145
        %v3147 = vpop.f32.mrb[0].mxu0
        %3148 = vmatprep.mubr.bf16.mxu0 %v2454
        %3149 = vmatmul.mubr.bf16.gmra.mrb[0].mxu0 %v2453
        %v3150 = vpop.f32.mrb[0].mxu0
        %v3151 = vadd.f32 %v2862, %v3150
        %v3152 = vpop.f32.mrb[0].mxu0
        %v3153 = vpop.f32.mrb[0].mxu0
        %v3154 = vadd.f32 %v2865, %v3153
        %v3155 = vpop.f32.mrb[0].mxu0
        %3156 = vmatprep.mubr.bf16.mxu0 %v2458
        %3157 = vmatmul.mubr.bf16.gmra.mrb[0].mxu0 %v2457
        %v3158 = vpop.f32.mrb[0].mxu0
        %v3159 = vadd.f32 %v2870, %v3158
        %v3160 = vpop.f32.mrb[0].mxu0
        %v3161 = vpop.f32.mrb[0].mxu0
        %v3162 = vadd.f32 %v2873, %v3161
        %v3163 = vpop.f32.mrb[0].mxu0
        %3164 = vdwg.mxu0
        %v3165 = vmax.f32 %v2911, 0.0
        %v3166 = vmax.f32 %v2914, 0.0
        %v3167 = vmax.f32 %v2919, 0.0
        %v3168 = vmax.f32 %v2922, 0.0
        %v3169 = vmax.f32 %v2927, 0.0
        %v3170 = vmax.f32 %v2930, 0.0
        %v3171 = vmax.f32 %v2935, 0.0
        %v3172 = vmax.f32 %v2938, 0.0
        %v3173 = vmax.f32 %v2943, 0.0
        %v3174 = vmax.f32 %v2946, 0.0
        %v3175 = vmax.f32 %v2951, 0.0
        %v3176 = vmax.f32 %v2954, 0.0
        %v3177 = vmax.f32 %v2959, 0.0
        %v3178 = vmax.f32 %v2962, 0.0
        %v3179 = vmax.f32 %v2967, 0.0
        %v3180 = vmax.f32 %v2970, 0.0
        %v3181 = vmax.f32 %v2975, 0.0
        %v3182 = vmax.f32 %v2978, 0.0
        %v3183 = vmax.f32 %v2983, 0.0
        %v3184 = vmax.f32 %v2986, 0.0
        %v3185 = vmax.f32 %v2991, 0.0
        %v3186 = vmax.f32 %v2994, 0.0
        %v3187 = vmax.f32 %v2999, 0.0
        %v3188 = vmax.f32 %v3002, 0.0
        %v3189 = vmax.f32 %v3007, 0.0
        %v3190 = vmax.f32 %v3010, 0.0
        %v3191 = vmax.f32 %v3015, 0.0
        %v3192 = vmax.f32 %v3018, 0.0
        %v3193 = vmax.f32 %v3023, 0.0
        %v3194 = vmax.f32 %v3026, 0.0
        %v3195 = vmax.f32 %v3031, 0.0
        %v3196 = vmax.f32 %v3034, 0.0
        %v3197 = vmax.f32 %v3039, 0.0
        %v3198 = vmax.f32 %v3042, 0.0
        %v3199 = vmax.f32 %v3047, 0.0
        %v3200 = vmax.f32 %v3050, 0.0
        %v3201 = vmax.f32 %v3055, 0.0
        %v3202 = vmax.f32 %v3058, 0.0
        %v3203 = vmax.f32 %v3063, 0.0
        %v3204 = vmax.f32 %v3066, 0.0
        %v3205 = vmax.f32 %v3071, 0.0
        %v3206 = vmax.f32 %v3074, 0.0
        %v3207 = vmax.f32 %v3079, 0.0
        %v3208 = vmax.f32 %v3082, 0.0
        %v3209 = vmax.f32 %v3087, 0.0
        %v3210 = vmax.f32 %v3090, 0.0
        %v3211 = vmax.f32 %v3095, 0.0
        %v3212 = vmax.f32 %v3098, 0.0
        %v3213 = vmax.f32 %v3103, 0.0
        %v3214 = vmax.f32 %v3106, 0.0
        %v3215 = vmax.f32 %v3111, 0.0
        %v3216 = vmax.f32 %v3114, 0.0
        %v3217 = vmax.f32 %v3119, 0.0
        %v3218 = vmax.f32 %v3122, 0.0
        %v3219 = vmax.f32 %v3127, 0.0
        %v3220 = vmax.f32 %v3130, 0.0
        %v3221 = vmax.f32 %v3135, 0.0
        %v3222 = vmax.f32 %v3138, 0.0
        %v3223 = vmax.f32 %v3143, 0.0
        %v3224 = vmax.f32 %v3146, 0.0
        %v3225 = vmax.f32 %v3151, 0.0
        %v3226 = vmax.f32 %v3154, 0.0
        %v3227 = vmax.f32 %v3159, 0.0
        %v3228 = vmax.f32 %v3162, 0.0
        %v3229 = vld [vmem:[%s5] sm:$0xff]
        %v3230 = vld [vmem:[%s5 + $0x8] sm:$0xff]
        %v3231 = vld [vmem:[%s5 + $0x10] sm:$0xff]
        %v3232 = vld [vmem:[%s5 + $0x18] sm:$0xff]
        %v3233 = vpack.c.bf16 %v3166, %v3165
        %v3234 = vpack.c.bf16 %v3168, %v3167
        %v3235 = vpack.c.bf16 %v3170, %v3169
        %v3236 = vpack.c.bf16 %v3172, %v3171
        %v3237 = vpack.c.bf16 %v3174, %v3173
        %v3238 = vpack.c.bf16 %v3176, %v3175
        %v3239 = vpack.c.bf16 %v3178, %v3177
        %v3240 = vpack.c.bf16 %v3180, %v3179
        %v3241 = vpack.c.bf16 %v3182, %v3181
        %v3242 = vpack.c.bf16 %v3184, %v3183
        %v3243 = vpack.c.bf16 %v3186, %v3185
        %v3244 = vpack.c.bf16 %v3188, %v3187
        %v3245 = vpack.c.bf16 %v3190, %v3189
        %v3246 = vpack.c.bf16 %v3192, %v3191
        %v3247 = vpack.c.bf16 %v3194, %v3193
        %v3248 = vpack.c.bf16 %v3196, %v3195
        %v3249 = vpack.c.bf16 %v3198, %v3197
        %v3250 = vpack.c.bf16 %v3200, %v3199
        %v3251 = vpack.c.bf16 %v3202, %v3201
        %v3252 = vpack.c.bf16 %v3204, %v3203
        %v3253 = vpack.c.bf16 %v3206, %v3205
        %v3254 = vpack.c.bf16 %v3208, %v3207
        %v3255 = vpack.c.bf16 %v3210, %v3209
        %v3256 = vpack.c.bf16 %v3212, %v3211
        %v3257 = vpack.c.bf16 %v3214, %v3213
        %v3258 = vpack.c.bf16 %v3216, %v3215
        %v3259 = vpack.c.bf16 %v3218, %v3217
        %v3260 = vpack.c.bf16 %v3220, %v3219
        %v3261 = vpack.c.bf16 %v3222, %v3221
        %v3262 = vpack.c.bf16 %v3224, %v3223
        %v3263 = vpack.c.bf16 %v3226, %v3225
        %v3264 = vpack.c.bf16 %v3228, %v3227
        %v3265 = vld [vmem:[%s6] sm:$0xff]
        %v3266 = vld [vmem:[%s6 + $0x8] sm:$0xff]
        %3268 = vset.pattern.permute.xlu0 0
        %3269 = vperm.xlu0 %3268, %v3265
        %v3270 = vpop.permute.xlu0 %3269
        %3273 = vset.pattern.permute.xlu0 0
        %3274 = vperm.xlu0 %3273, %v3266
        %v3275 = vpop.permute.xlu0 %3274
        %v3281 = vunpack.c.l.b16 %v3229
        %v3282 = vunpack.c.h.b16 %v3229
        %v3283 = vunpack.c.l.b16 %v3230
        %v3284 = vunpack.c.h.b16 %v3230
        %v3285 = vunpack.c.l.b16 %v3231
        %v3286 = vunpack.c.h.b16 %v3231
        %v3287 = vunpack.c.l.b16 %v3232
        %v3288 = vunpack.c.h.b16 %v3232
        %v3289 = vpack.c.b16 %v3285, %v3281
        %v3290 = vpack.c.b16 %v3286, %v3282
        %v3291 = vpack.c.b16 %v3287, %v3283
        %v3292 = vpack.c.b16 %v3288, %v3284
        %3297 = vmatprep.subr.bf16.mxu0 0
        %3298 = vmatpush1.bf16.msra.mxu0 %v3233
        %3299 = vmatprep.subr.bf16.mxu0 0
        %3300 = vmatpush1.bf16.msra.mxu0 %v3234
        %3301 = vmatprep.subr.bf16.mxu0 0
        %3302 = vmatpush1.bf16.msra.mxu0 %v3235
        %3303 = vmatprep.subr.bf16.mxu0 0
        %3304 = vmatpush1.bf16.msra.mxu0 %v3236
        %3305 = vmatprep.subr.bf16.mxu0 0
        %3306 = vmatpush1.bf16.msra.mxu0 %v3237
        %3307 = vmatprep.subr.bf16.mxu0 0
        %3308 = vmatpush1.bf16.msra.mxu0 %v3238
        %3309 = vmatprep.subr.bf16.mxu0 0
        %3310 = vmatpush1.bf16.msra.mxu0 %v3239
        %3311 = vmatprep.subr.bf16.mxu0 0
        %3312 = vmatpush1.bf16.msra.mxu0 %v3240
        %3313 = vmatprep.subr.bf16.mxu0 0
        %3314 = vmatpush1.bf16.msra.mxu0 %v3241
        %3315 = vmatprep.subr.bf16.mxu0 0
        %3316 = vmatpush1.bf16.msra.mxu0 %v3242
        %3317 = vmatprep.subr.bf16.mxu0 0
        %3318 = vmatpush1.bf16.msra.mxu0 %v3243
        %3319 = vmatprep.subr.bf16.mxu0 0
        %3320 = vmatpush1.bf16.msra.mxu0 %v3244
        %3321 = vmatprep.subr.bf16.mxu0 0
        %3322 = vmatpush1.bf16.msra.mxu0 %v3245
        %3323 = vmatprep.subr.bf16.mxu0 0
        %3324 = vmatpush1.bf16.msra.mxu0 %v3246
        %3325 = vmatprep.subr.bf16.mxu0 0
        %3326 = vmatpush1.bf16.msra.mxu0 %v3247
        %3327 = vmatprep.subr.bf16.mxu0 0
        %3328 = vmatpush1.bf16.msra.mxu0 %v3248
        %3329 = vmatprep.mubr.bf16.mxu0 %v3290
        %3330 = vmatmul.mubr.bf16.gmra.mrb[0].mxu0 %v3289
        %v3331 = vpop.f32.mrb[0].mxu0
        %v3332 = vadd.f32 %v3270, %v3331
        %v3333 = vpop.f32.mrb[0].mxu0
        %v3334 = vpop.f32.mrb[0].mxu0
        %v3335 = vadd.f32 %v3275, %v3334
        %v3336 = vpop.f32.mrb[0].mxu0
        %3337 = vdwg.mxu0
        %3338 = vmatprep.subr.bf16.mxu0 0
        %3339 = vmatpush1.bf16.msra.mxu0 %v3249
        %3340 = vmatprep.subr.bf16.mxu0 0
        %3341 = vmatpush1.bf16.msra.mxu0 %v3250
        %3342 = vmatprep.subr.bf16.mxu0 0
        %3343 = vmatpush1.bf16.msra.mxu0 %v3251
        %3344 = vmatprep.subr.bf16.mxu0 0
        %3345 = vmatpush1.bf16.msra.mxu0 %v3252
        %3346 = vmatprep.subr.bf16.mxu0 0
        %3347 = vmatpush1.bf16.msra.mxu0 %v3253
        %3348 = vmatprep.subr.bf16.mxu0 0
        %3349 = vmatpush1.bf16.msra.mxu0 %v3254
        %3350 = vmatprep.subr.bf16.mxu0 0
        %3351 = vmatpush1.bf16.msra.mxu0 %v3255
        %3352 = vmatprep.subr.bf16.mxu0 0
        %3353 = vmatpush1.bf16.msra.mxu0 %v3256
        %3354 = vmatprep.subr.bf16.mxu0 0
        %3355 = vmatpush1.bf16.msra.mxu0 %v3257
        %3356 = vmatprep.subr.bf16.mxu0 0
        %3357 = vmatpush1.bf16.msra.mxu0 %v3258
        %3358 = vmatprep.subr.bf16.mxu0 0
        %3359 = vmatpush1.bf16.msra.mxu0 %v3259
        %3360 = vmatprep.subr.bf16.mxu0 0
        %3361 = vmatpush1.bf16.msra.mxu0 %v3260
        %3362 = vmatprep.subr.bf16.mxu0 0
        %3363 = vmatpush1.bf16.msra.mxu0 %v3261
        %3364 = vmatprep.subr.bf16.mxu0 0
        %3365 = vmatpush1.bf16.msra.mxu0 %v3262
        %3366 = vmatprep.subr.bf16.mxu0 0
        %3367 = vmatpush1.bf16.msra.mxu0 %v3263
        %3368 = vmatprep.subr.bf16.mxu0 0
        %3369 = vmatpush1.bf16.msra.mxu0 %v3264
        %3370 = vmatprep.mubr.bf16.mxu0 %v3292
        %3371 = vmatmul.mubr.bf16.gmra.mrb[0].mxu0 %v3291
        %v3372 = vpop.f32.mrb[0].mxu0
        %v3373 = vadd.f32 %v3332, %v3372
        %v3374 = vpop.f32.mrb[0].mxu0
        %v3375 = vpop.f32.mrb[0].mxu0
        %v3376 = vadd.f32 %v3335, %v3375
        %v3377 = vpop.f32.mrb[0].mxu0
        %3378 = vdwg.mxu0
        %3379 = vst [vmem:[%s335] sm:$0xff] %v3373
        %3380 = vst [vmem:[%s335 + $0x8] sm:$0xff] %v3376
        %s3381 = sand.u32 %s194, 1
        %s3382 = sand.u32 %s194, 1
        %s3383 = smul.addr %s3382, 16
        %s3384 = scalar_lea.vmem [#allocation3], %s3383
        // Predicated region
        $region90: #{mrfnet_forward.1} parent=84 // pred_check
          %p3385 = pneg %p204
        $region91: #{mrfnet_forward.1} parent=84 // pred_check_branch
          %3387 = sbr.rel (%p3385) target = $region93
        $region92: #{mrfnet_forward.1} parent=84 // pred_region
          %s3388 = smul.addr %s22, 4
          %s3389 = sadd.s32 %s23, %s3388
          %s3390 = smul.addr %s3389, 8
          %s3391 = scalar_lea.vmem %s7, %s3390
          // Predicated region
          $region94: #{mrfnet_forward.1} parent=92 // pred_check
            _
          $region95: #{mrfnet_forward.1} parent=92 // pred_check_branch
            %3393 = sbr.rel (0) target = $region97
          $region96: #{mrfnet_forward.1} parent=92 // pred_region
            // Predicated region
            $region98: #{mrfnet_forward.1} parent=96 // pred_check
              _
            $region99: #{mrfnet_forward.1} parent=96 // pred_check_branch
              %3395 = sbr.rel (0) target = $region101
            $region100: #{mrfnet_forward.1} parent=96 // pred_region
              // Predicated region
              $region113: #{mrfnet_forward.1} parent=100 // pred_check
                _
              $region114: #{mrfnet_forward.1} parent=100 // pred_check_branch
                %3412 = sbr.rel (0) target = $region116
              $region115: #{mrfnet_forward.1} parent=100 // pred_region
                loop: start=0, step=1, limit=1
                $region117: #{mrfnet_forward.1} parent=115 // loop_pre_header
                  _
                $region118: #{mrfnet_forward.1} parent=115 // loop_header
                  %s3414 = sphi 0, %s3418
                  %p3415 = scmp.ge.s32.totalorder %s3414, 1
                  %s3419 = sphi %s3384, %s3384
                  %s3420 = sphi %s3391, %s3391
                $region119: #{mrfnet_forward.1} parent=115 // loop_header_branch
                  %3417 = sbr.rel (%p3415) target = $region123
                $region120: #{mrfnet_forward.1} parent=115 // loop_body
                  %v3421 = vld [vmem:[%s3419] sm:$0xff]
                  %3422 = vst [vmem:[%s3420] sm:$0xff] %v3421
                  %v3423 = vld [vmem:[%s3419 + $0x8] sm:$0xff]
                  %3424 = vst [vmem:[%s3420 + $0x10] sm:$0xff] %v3423
                $region121: #{mrfnet_forward.1} parent=115 // loop_footer
                  %s3418 = sadd.s32 1, %s3414
                $region122: #{mrfnet_forward.1} parent=115 // loop_footer_branch
                  %3413 = sbr.rel target = $region118
                $region123: #{mrfnet_forward.1} parent=115 // loop_exit
                  _
              $region116: #{mrfnet_forward.1} parent=100 // pred_fallthru
                _
              // Predicated region
              $region124: #{mrfnet_forward.1} parent=100 // pred_check
                _
              $region125: #{mrfnet_forward.1} parent=100 // pred_check_branch
                %3426 = sbr.rel target = $region127
              $region126: #{mrfnet_forward.1} parent=100 // pred_region
                _
              $region127: #{mrfnet_forward.1} parent=100 // pred_fallthru
                _
            $region101: #{mrfnet_forward.1} parent=96 // pred_fallthru
              _
            // Predicated region
            $region102: #{mrfnet_forward.1} parent=96 // pred_check
              _
            $region103: #{mrfnet_forward.1} parent=96 // pred_check_branch
              %3397 = sbr.rel target = $region105
            $region104: #{mrfnet_forward.1} parent=96 // pred_region
              loop: start=0, step=1, limit=1
              $region106: #{mrfnet_forward.1} parent=104 // loop_pre_header
                _
              $region107: #{mrfnet_forward.1} parent=104 // loop_header
                %s3400 = sphi 0, %s3404
                %p3401 = scmp.ge.s32.totalorder %s3400, 1
                %s3405 = sphi %s3384, %s3384
                %s3406 = sphi %s3391, %s3391
              $region108: #{mrfnet_forward.1} parent=104 // loop_header_branch
                %3403 = sbr.rel (%p3401) target = $region112
              $region109: #{mrfnet_forward.1} parent=104 // loop_body
                %v3407 = vld [vmem:[%s3405] sm:$0xff]
                %3408 = vst [vmem:[%s3406] sm:$0xff] %v3407
                %v3409 = vld [vmem:[%s3405 + $0x8] sm:$0xff]
                %3410 = vst [vmem:[%s3406 + $0x10] sm:$0xff] %v3409
              $region110: #{mrfnet_forward.1} parent=104 // loop_footer
                %s3404 = sadd.s32 1, %s3400
              $region111: #{mrfnet_forward.1} parent=104 // loop_footer_branch
                %3399 = sbr.rel target = $region107
              $region112: #{mrfnet_forward.1} parent=104 // loop_exit
                _
            $region105: #{mrfnet_forward.1} parent=96 // pred_fallthru
              _
          $region97: #{mrfnet_forward.1} parent=92 // pred_fallthru
            _
          %3427 = vnop
        $region93: #{mrfnet_forward.1} parent=84 // pred_fallthru
          _
      $region85: #{mrfnet_forward.1} parent=5 // pred_fallthru
        _
      %p3428 = scmp.le.s32.totalorder 2, %s13
      // Predicated region
      $region128: #{mrfnet_forward.1} parent=5 // pred_check
        %p3429 = pneg %p3428
      $region129: #{mrfnet_forward.1} parent=5 // pred_check_branch
        %3431 = sbr.rel (%p3429) target = $region131
      $region130: #{mrfnet_forward.1} parent=5 // pred_region
        %s3432 = ssub.s32 %s13, 2
        // Predicated region
        $region132: #{mrfnet_forward.1} parent=130 // pred_check
          %p3433 = pneg %p210
        $region133: #{mrfnet_forward.1} parent=130 // pred_check_branch
          %3435 = sbr.rel (%p3433) target = $region135
        $region134: #{mrfnet_forward.1} parent=130 // pred_region
          %s3436 = sand.u32 %s195, 1
          %s3437 = sand.u32 %s195, 1
          %s3438 = smul.addr %s3437, 16
          %s3439 = scalar_lea.vmem [#allocation3], %s3438
        $region135: #{mrfnet_forward.1} parent=130 // pred_fallthru
          _
      $region131: #{mrfnet_forward.1} parent=5 // pred_fallthru
        _
    $region6: #{mrfnet_forward.1} parent=1 // loop_footer
      %s17 = sadd.s32 1, %s13
    $region7: #{mrfnet_forward.1} parent=1 // loop_footer_branch
      %12 = sbr.rel target = $region3
    $region8: #{mrfnet_forward.1} parent=1 // loop_exit
      _

</llo_original>
